<compile_context>
chip_gen: v5e
topology: v5e:2x2
jax: 0.10.0
libtpu: 0.0.40
codegen_flags: <defaults>
</compile_context>

<pallas_src>
import math
from functools import partial

import jax
import jax.numpy as jnp
from jax.experimental import pallas as pl
from jax.experimental.pallas import tpu as pltpu

EPS = 1e-5
_NEG_BIG = -1e30


def _layernorm(x, g, b):
    mu = jnp.mean(x, axis=-1, keepdims=True)
    var = jnp.mean((x - mu) ** 2, axis=-1, keepdims=True)
    return (x - mu) * jax.lax.rsqrt(var + EPS) * g + b


def _round_up(x, m):
    return -(-x // m) * m


def _pick_vmem_limit():
    """Explicit scoped-VMEM budget (the 16-32 MiB defaults are too small at
    production E/L1).  Leave ~8 MiB headroom for compiler scratch; cap at 100 MiB
    (safe on v5e/v6e's 128 MiB) and follow the chip's capacity on v7x (64 MiB)."""
    try:
        cap = pltpu.get_tpu_info().vmem_capacity_bytes
    except Exception:  # pragma: no cover - conservative fallback
        cap = 64 * 1024 * 1024
    return int(min(cap - 8 * 1024 * 1024, 100 * 1024 * 1024))


def _class_block_kernel(x_ref, cls_ref,
                        ln1g_ref, ln1b_ref,
                        wq_ref, bq_ref,          # Wq/bq pre-scaled by 1/sqrt(head_dim)
                        wkv_ref, bkv_ref,        # packed [Wk | Wv]: (E, 2E), (1, 2E)
                        wo_ref, bo_ref,
                        ln2g_ref, ln2b_ref,
                        w1_ref, b1_ref,
                        ln3g_ref, ln3b_ref,
                        w2_ref, b2_ref,
                        hmat_ref, hmatT_ref,
                        out_ref,
                        q_sc, m_sc, l_sc, acc_sc,
                        *, seq_len):
    ST, BT, E = x_ref.shape
    H = hmat_ref.shape[1]
    cdt = wkv_ref.dtype                      # MXU feed dtype (bf16 in production)
    s_idx = pl.program_id(1)

    ln1g = ln1g_ref[...]
    ln1b = ln1b_ref[...]
    hmat = hmat_ref[...]                     # (E, H) one-hot head grouping, f32
    hmat_t = hmatT_ref[...]                  # (H, E)

    # ---- first sequence step: class-token projections + online-softmax init ----
    @pl.when(s_idx == 0)
    def _init():
        cls = cls_ref[0].astype(jnp.float32)                          # (BT, E) raw
        cls_n = _layernorm(cls, ln1g, ln1b)
        q = jnp.dot(cls.astype(cdt), wq_ref[...],
                    preferred_element_type=jnp.float32) + bq_ref[...]  # (BT, E)
        q_sc[...] = q
        kv_c = jnp.dot(cls_n.astype(cdt), wkv_ref[...],
                       preferred_element_type=jnp.float32) + bkv_ref[...]  # (BT, 2E)
        k_c = kv_c[:, :E]
        v_c = kv_c[:, E:]
        # the class-token key seeds the running max / denom / numerator:
        # p = exp(score - m) = 1 for the seeding key.
        m_sc[...] = jnp.dot(k_c * q, hmat, preferred_element_type=jnp.float32)
        l_sc[...] = jnp.ones((BT, H), jnp.float32)
        acc_sc[...] = v_c

    # ---- every step: one sequence chunk, flash-style online softmax ------------
    x = x_ref[...].astype(jnp.float32).reshape(ST * BT, E)
    xn = _layernorm(x, ln1g, ln1b)
    kv = jnp.dot(xn.astype(cdt), wkv_ref[...],
                 preferred_element_type=jnp.float32) + bkv_ref[...]    # (ST*BT, 2E)
    k_x = kv[:, :E]
    v_x = kv[:, E:]

    q = q_sc[...]                                                      # (BT, E)
    # implicit broadcast of q over the chunk (no (ST*BT, E) q materialization)
    kq = (k_x.reshape(ST, BT, E) * q[None]).reshape(ST * BT, E)
    # per-head score = sum of q*k over that head's dims (one-hot matmul, f32)
    scores = jnp.dot(kq, hmat,
                     preferred_element_type=jnp.float32).reshape(ST, BT, H)
    if seq_len % ST != 0:   # mask padded sequence rows of the last chunk (static)
        row = jax.lax.broadcasted_iota(jnp.int32, (ST, BT, H), 0) + s_idx * ST
        scores = jnp.where(row < seq_len, scores, _NEG_BIG)

    m_prev = m_sc[...]
    m_new = jnp.maximum(m_prev, jnp.max(scores, axis=0))               # (BT, H)
    alpha = jnp.exp(m_prev - m_new)
    p = jnp.exp(scores - m_new[None])                                  # (ST, BT, H)
    l_sc[...] = alpha * l_sc[...] + jnp.sum(p, axis=0)

    p_full = jnp.dot(p.reshape(ST * BT, H), hmat_t,
                     preferred_element_type=jnp.float32)               # (ST*BT, E)
    chunk_acc = jnp.sum((p_full * v_x).reshape(ST, BT, E), axis=0)     # (BT, E)
    alpha_full = jnp.dot(alpha, hmat_t, preferred_element_type=jnp.float32)
    acc_sc[...] = alpha_full * acc_sc[...] + chunk_acc
    m_sc[...] = m_new

    # ---- last step: normalize, output projection, LN2 + residual, MLP ----------
    @pl.when(s_idx == pl.num_programs(1) - 1)
    def _finalize():
        cls = cls_ref[0].astype(jnp.float32)
        l = l_sc[...]
        inv = pl.reciprocal(l, approx=True)     # EUP; taken on (BT, H) pre-expansion
        inv = inv * (2.0 - l * inv)             # one Newton step -> ~f32 exact
        inv_full = jnp.dot(inv, hmat_t, preferred_element_type=jnp.float32)
        attn = acc_sc[...] * inv_full                                   # (BT, E)
        attn_o = jnp.dot(attn.astype(cdt), wo_ref[...],
                         preferred_element_type=jnp.float32) + bo_ref[...]
        x2 = cls + _layernorm(attn_o, ln2g_ref[...], ln2b_ref[...])
        h = jnp.maximum(jnp.dot(x2.astype(cdt), w1_ref[...],
                                preferred_element_type=jnp.float32) + b1_ref[...],
                        0.0)
        hn = _layernorm(h, ln3g_ref[...], ln3b_ref[...])
        y = jnp.dot(hn.astype(cdt), w2_ref[...],
                    preferred_element_type=jnp.float32) + b2_ref[...]
        out_ref[...] = (x2 + y).astype(out_ref.dtype)


def init_params(key, embed_dims, linear_dims1, linear_dims2, num_heads):
    assert embed_dims % num_heads == 0
    ks = jax.random.split(key, 16)
    s = 0.05
    E, L1, L2, H = embed_dims, linear_dims1, linear_dims2, num_heads
    hd = E // H
    # head-grouping one-hot matrix: M[e, h] = 1 if embedding dim e belongs to head h
    hmat = (jnp.arange(E)[:, None] // hd == jnp.arange(H)[None, :]).astype(jnp.float32)
    p = dict(
        ln1_g=jnp.ones((1, E)) + 0.01 * jax.random.normal(ks[0], (1, E)),
        ln1_b=0.01 * jax.random.normal(ks[1], (1, E)),
        wq=s * jax.random.normal(ks[2], (E, E)),   # stored (in, out): y = x @ W + b
        bq=s * jax.random.normal(ks[3], (1, E)),
        wk=s * jax.random.normal(ks[4], (E, E)),
        bk=s * jax.random.normal(ks[5], (1, E)),
        wv=s * jax.random.normal(ks[6], (E, E)),
        bv=s * jax.random.normal(ks[7], (1, E)),
        wo=s * jax.random.normal(ks[8], (E, E)),
        bo=s * jax.random.normal(ks[9], (1, E)),
        ln2_g=jnp.ones((1, E)),
        ln2_b=jnp.zeros((1, E)),
        w1=s * jax.random.normal(ks[10], (E, L1)),
        b1=s * jax.random.normal(ks[11], (1, L1)),
        ln3_g=jnp.ones((1, L1)) + 0.01 * jax.random.normal(ks[12], (1, L1)),
        ln3_b=0.01 * jax.random.normal(ks[13], (1, L1)),
        w2=s * jax.random.normal(ks[14], (L1, L2)),
        b2=s * jax.random.normal(ks[15], (1, L2)),
        hmat=hmat,
        hmat_t=hmat.T,
    )
    return {k: v.astype(jnp.float32) for k, v in p.items()}


def prepare_kernel_weights(params, compute_dtype=jnp.bfloat16):
    """Pack / pre-scale / cast the weights consumed by the fused kernel (done once).

    * 1/sqrt(head_dim) is folded into Wq / bq.
    * K and V projections are packed into one stacked (E, 2E) weight.
    * Matmul weights are cast to `compute_dtype` (bf16 MXU feed by default, halving
      HBM/VMEM for weights); biases, LayerNorm params and the one-hot head-grouping
      matrices stay f32 so the softmax / LayerNorm math keeps full precision.
    """
    E = params["wq"].shape[0]
    H = params["hmat"].shape[1]
    scale = 1.0 / math.sqrt(E // H)
    return dict(
        ln1_g=params["ln1_g"], ln1_b=params["ln1_b"],
        wq_s=(params["wq"] * scale).astype(compute_dtype),
        bq_s=params["bq"] * scale,
        w_kv=jnp.concatenate([params["wk"], params["wv"]], axis=1).astype(compute_dtype),
        b_kv=jnp.concatenate([params["bk"], params["bv"]], axis=1),
        wo=params["wo"].astype(compute_dtype), bo=params["bo"],
        ln2_g=params["ln2_g"], ln2_b=params["ln2_b"],
        w1=params["w1"].astype(compute_dtype), b1=params["b1"],
        ln3_g=params["ln3_g"], ln3_b=params["ln3_b"],
        w2=params["w2"].astype(compute_dtype), b2=params["b2"],
        hmat=params["hmat"], hmat_t=params["hmat_t"],
    )


@partial(jax.jit, static_argnames=("block_batch", "seq_tile"))
def class_block_forward(x, class_token, kernel_weights, block_batch=128, seq_tile=None):
    """x: (S, B, E) seq-first, class_token: (1, B, E).  Returns (1, B, E) float32.

    block_batch: batch rows per grid step == M of the q / attn_out / MLP matmuls.
        128 fills a v5e MXU; try 256 on v6e/v7x if VMEM allows.  Must be a multiple
        of 8 (use a multiple of 16 with bf16 inputs).  With B > block_batch the
        batch axis has >= 2 "parallel" grid steps (feeds v7x's two TensorCores).
    seq_tile: sequence rows streamed per inner "arbitrary" grid step (online
        softmax).  None -> auto-picked so each K/V matmul chunk has ~1K rows,
        keeping the (ST*BT, E) f32 intermediates bounded independent of BT.
    """
    assert block_batch % 8 == 0
    S, B, E = x.shape
    assert class_token.shape == (1, B, E)
    H = kernel_weights["hmat"].shape[1]
    L2 = kernel_weights["w2"].shape[1]
    assert L2 == E, "final residual (x + linear2(...)) requires linear_dims2 == embed_dims"

    cdt = kernel_weights["w_kv"].dtype          # MXU feed dtype (bf16 by default)

    # ---- batch tiling: pad to an 8-aligned tile, BT rows per grid step ----
    BT = min(block_batch, _round_up(B, 8))
    B_pad = _round_up(B, BT)
    nb = B_pad // BT

    # ---- sequence tiling: stream S in chunks so BT is not VMEM-capped ----
    if seq_tile is None:
        seq_tile = max(8, 1024 // BT)
    ns = -(-S // seq_tile)
    ST = -(-S // ns)                            # balanced chunk size
    S_pad = ns * ST

    x = x.astype(cdt)                           # bf16 in HBM halves x traffic
    if S_pad != S or B_pad != B:
        x = jnp.pad(x, ((0, S_pad - S), (0, B_pad - B), (0, 0)))
    cls = class_token.astype(jnp.float32)       # small; kept f32 for the residual
    if B_pad != B:
        cls = jnp.pad(cls, ((0, 0), (0, B_pad - B), (0, 0)))

    names = ["ln1_g", "ln1_b", "wq_s", "bq_s", "w_kv", "b_kv", "wo", "bo",
             "ln2_g", "ln2_b", "w1", "b1", "ln3_g", "ln3_b", "w2", "b2",
             "hmat", "hmat_t"]
    weights = [kernel_weights[n] for n in names]

    def wspec(w):
        # resident weight: constant index_map + single buffer (halves weight VMEM)
        return pl.BlockSpec(w.shape, lambda b, s: (0,) * w.ndim,
                            pipeline_mode=pl.Buffered(1))

    in_specs = [
        pl.BlockSpec((ST, BT, E), lambda b, s: (s, b, 0)),   # x chunk (seq-first)
        pl.BlockSpec((1, BT, E), lambda b, s: (0, b, 0)),    # raw class tokens
    ] + [wspec(w) for w in weights]

    out = pl.pallas_call(
        partial(_class_block_kernel, seq_len=S),
        out_shape=jax.ShapeDtypeStruct((B_pad, E), jnp.float32),
        grid=(nb, ns),
        in_specs=in_specs,
        out_specs=pl.BlockSpec((BT, E), lambda b, s: (b, 0)),   # resident across s
        scratch_shapes=[
            pltpu.VMEM((BT, E), jnp.float32),   # q projection (scale folded in)
            pltpu.VMEM((BT, H), jnp.float32),   # running per-head row max
            pltpu.VMEM((BT, H), jnp.float32),   # running per-head softmax denom
            pltpu.VMEM((BT, E), jnp.float32),   # unnormalized attention numerator
        ],
        compiler_params=pltpu.CompilerParams(
            dimension_semantics=("parallel", "arbitrary"),
            vmem_limit_bytes=_pick_vmem_limit(),
        ),
    )(x, cls, *weights)

    return out[:B][None]                        # (1, B, E)


def ref_forward(x, class_token, P, num_heads):
    """Pure-JAX reference replicating the PyTorch forward (mask=None), f32."""
    def ln(z, g, b):
        mu = z.mean(-1, keepdims=True)
        var = ((z - mu) ** 2).mean(-1, keepdims=True)
        return (z - mu) / jnp.sqrt(var + EPS) * g + b

    xc = jnp.concatenate([class_token, x], axis=0)            # (S+1, B, E)
    xn = ln(xc, P["ln1_g"][0], P["ln1_b"][0])
    q = jnp.einsum("tbe,ef->tbf", class_token, P["wq"]) + P["bq"][0]
    k = jnp.einsum("sbe,ef->sbf", xn, P["wk"]) + P["bk"][0]
    v = jnp.einsum("sbe,ef->sbf", xn, P["wv"]) + P["bv"][0]
    T, B, E = q.shape
    S1 = k.shape[0]
    H = num_heads
    hd = E // H
    qh = q.reshape(T, B, H, hd)
    kh = k.reshape(S1, B, H, hd)
    vh = v.reshape(S1, B, H, hd)
    scores = jnp.einsum("tbhd,sbhd->bhts", qh, kh) / math.sqrt(hd)
    probs = jax.nn.softmax(scores, axis=-1)
    oh = jnp.einsum("bhts,sbhd->tbhd", probs, vh).reshape(T, B, E)
    attn = jnp.einsum("tbe,ef->tbf", oh, P["wo"]) + P["bo"][0]
    x2 = class_token + ln(attn, P["ln2_g"][0], P["ln2_b"][0])
    h = jax.nn.relu(jnp.einsum("tbe,el->tbl", x2, P["w1"]) + P["b1"][0])
    hn = ln(h, P["ln3_g"][0], P["ln3_b"][0])
    y = jnp.einsum("tbl,lf->tbf", hn, P["w2"]) + P["b2"][0]
    return x2 + y


if __name__ == "__main__":
    # Small shapes consistent with the module's forward:
    #   embed_dims=32, num_heads=8, linear_dims1=64, linear_dims2=32 (== embed_dims)
    S, B, E = 8, 2, 32
    H, L1, L2 = 8, 64, 32

    key = jax.random.PRNGKey(0)
    kx, kc, kp = jax.random.split(key, 3)
    x = jax.random.normal(kx, (S, B, E), jnp.float32)
    class_token = jax.random.normal(kc, (1, B, E), jnp.float32)
    params = init_params(kp, E, L1, L2, H)

    ref = ref_forward(x, class_token, params, H)

    # f32 MXU feed: validates the fused algorithm (online-softmax S-tiling, packed
    # KV, folded 1/sqrt(hd), deferred normalization, batch padding) vs the reference.
    out32 = class_block_forward(x, class_token,
                                prepare_kernel_weights(params, jnp.float32))
    out32 = jax.block_until_ready(out32)
    assert out32.shape == (1, B, E), out32.shape
    err32 = float(jnp.max(jnp.abs(out32 - ref)))
    assert err32 < 1e-2, f"f32 max abs err {err32}"

    # bf16 MXU feed (production default): halves HBM/VMEM traffic and ~doubles MXU
    # throughput on v6e/v7x; accumulation and all LayerNorm/softmax math stay f32,
    # so the looser tolerance only reflects bf16 rounding of the matmul inputs.
    out16 = class_block_forward(x, class_token,
                                prepare_kernel_weights(params, jnp.bfloat16))
    out16 = jax.block_until_ready(out16)
    assert out16.shape == (1, B, E), out16.shape
    err16 = float(jnp.max(jnp.abs(out16 - ref)))
    assert err16 < 5e-2, f"bf16 max abs err {err16}"

    print("KERNEL_OK")
</pallas_src>

<mosaic_0001>
module attributes {stable_mosaic.version = 11 : i64} {
  func.func @_class_block_kernel(%arg0: i32, %arg1: i32, %arg2: memref<8x8x32xf32, #tpu.memory_space<vmem>>, %arg3: memref<1x8x32xf32, #tpu.memory_space<vmem>>, %arg4: memref<1x32xf32, #tpu.memory_space<vmem>>, %arg5: memref<1x32xf32, #tpu.memory_space<vmem>>, %arg6: memref<32x32xf32, #tpu.memory_space<vmem>>, %arg7: memref<1x32xf32, #tpu.memory_space<vmem>>, %arg8: memref<32x64xf32, #tpu.memory_space<vmem>>, %arg9: memref<1x64xf32, #tpu.memory_space<vmem>>, %arg10: memref<32x32xf32, #tpu.memory_space<vmem>>, %arg11: memref<1x32xf32, #tpu.memory_space<vmem>>, %arg12: memref<1x32xf32, #tpu.memory_space<vmem>>, %arg13: memref<1x32xf32, #tpu.memory_space<vmem>>, %arg14: memref<32x64xf32, #tpu.memory_space<vmem>>, %arg15: memref<1x64xf32, #tpu.memory_space<vmem>>, %arg16: memref<1x64xf32, #tpu.memory_space<vmem>>, %arg17: memref<1x64xf32, #tpu.memory_space<vmem>>, %arg18: memref<64x32xf32, #tpu.memory_space<vmem>>, %arg19: memref<1x32xf32, #tpu.memory_space<vmem>>, %arg20: memref<32x8xf32, #tpu.memory_space<vmem>>, %arg21: memref<8x32xf32, #tpu.memory_space<vmem>>, %arg22: memref<8x32xf32, #tpu.memory_space<vmem>>, %arg23: memref<8x32xf32, #tpu.memory_space<vmem>>, %arg24: memref<8x8xf32, #tpu.memory_space<vmem>>, %arg25: memref<8x8xf32, #tpu.memory_space<vmem>>, %arg26: memref<8x32xf32, #tpu.memory_space<vmem>>) attributes {dimension_semantics = [#tpu.dimension_semantics<parallel>, #tpu.dimension_semantics<arbitrary>], iteration_bounds = array<i64: 1, 1>, scalar_prefetch = 0 : i64, scratch_operands = 4 : i64, tpu.core_type = #tpu.core_type<tc>, window_params = [{transform_indices = @transform_0, window_bounds = array<i64: 8, 8, 32>}, {transform_indices = @transform_1, window_bounds = array<i64: 1, 8, 32>}, {pipeline_mode = #tpu.pipeline_mode<synchronous>, transform_indices = @transform_2, window_bounds = array<i64: 1, 32>}, {pipeline_mode = #tpu.pipeline_mode<synchronous>, transform_indices = @transform_3, window_bounds = array<i64: 1, 32>}, {pipeline_mode = #tpu.pipeline_mode<synchronous>, transform_indices = @transform_4, window_bounds = array<i64: 32, 32>}, {pipeline_mode = #tpu.pipeline_mode<synchronous>, transform_indices = @transform_5, window_bounds = array<i64: 1, 32>}, {pipeline_mode = #tpu.pipeline_mode<synchronous>, transform_indices = @transform_6, window_bounds = array<i64: 32, 64>}, {pipeline_mode = #tpu.pipeline_mode<synchronous>, transform_indices = @transform_7, window_bounds = array<i64: 1, 64>}, {pipeline_mode = #tpu.pipeline_mode<synchronous>, transform_indices = @transform_8, window_bounds = array<i64: 32, 32>}, {pipeline_mode = #tpu.pipeline_mode<synchronous>, transform_indices = @transform_9, window_bounds = array<i64: 1, 32>}, {pipeline_mode = #tpu.pipeline_mode<synchronous>, transform_indices = @transform_10, window_bounds = array<i64: 1, 32>}, {pipeline_mode = #tpu.pipeline_mode<synchronous>, transform_indices = @transform_11, window_bounds = array<i64: 1, 32>}, {pipeline_mode = #tpu.pipeline_mode<synchronous>, transform_indices = @transform_12, window_bounds = array<i64: 32, 64>}, {pipeline_mode = #tpu.pipeline_mode<synchronous>, transform_indices = @transform_13, window_bounds = array<i64: 1, 64>}, {pipeline_mode = #tpu.pipeline_mode<synchronous>, transform_indices = @transform_14, window_bounds = array<i64: 1, 64>}, {pipeline_mode = #tpu.pipeline_mode<synchronous>, transform_indices = @transform_15, window_bounds = array<i64: 1, 64>}, {pipeline_mode = #tpu.pipeline_mode<synchronous>, transform_indices = @transform_16, window_bounds = array<i64: 64, 32>}, {pipeline_mode = #tpu.pipeline_mode<synchronous>, transform_indices = @transform_17, window_bounds = array<i64: 1, 32>}, {pipeline_mode = #tpu.pipeline_mode<synchronous>, transform_indices = @transform_18, window_bounds = array<i64: 32, 8>}, {pipeline_mode = #tpu.pipeline_mode<synchronous>, transform_indices = @transform_19, window_bounds = array<i64: 8, 32>}, {transform_indices = @transform_20, window_bounds = array<i64: 8, 32>}]} {
    %c0 = arith.constant 0 : index
    %c0_0 = arith.constant 0 : index
    %0 = vector.load %arg4[%c0, %c0_0] : memref<1x32xf32, #tpu.memory_space<vmem>>, vector<1x32xf32>
    %c0_1 = arith.constant 0 : index
    %c0_2 = arith.constant 0 : index
    %1 = vector.load %arg5[%c0_1, %c0_2] : memref<1x32xf32, #tpu.memory_space<vmem>>, vector<1x32xf32>
    %c0_3 = arith.constant 0 : index
    %c0_4 = arith.constant 0 : index
    %2 = vector.load %arg20[%c0_3, %c0_4] : memref<32x8xf32, #tpu.memory_space<vmem>>, vector<32x8xf32>
    %c0_5 = arith.constant 0 : index
    %c0_6 = arith.constant 0 : index
    %3 = vector.load %arg21[%c0_5, %c0_6] : memref<8x32xf32, #tpu.memory_space<vmem>>, vector<8x32xf32>
    %c0_i32 = arith.constant 0 : i32
    %4 = arith.cmpi eq, %arg1, %c0_i32 : i32
    %5 = arith.extui %4 : i1 to i32
    %c0_i32_7 = arith.constant 0 : i32
    %6 = arith.cmpi ne, %5, %c0_i32_7 : i32
    scf.if %6 {
      %c0_42 = arith.constant 0 : index
      %c0_43 = arith.constant 0 : index
      %c0_44 = arith.constant 0 : index
      %74 = vector.load %arg3[%c0_42, %c0_43, %c0_44] : memref<1x8x32xf32, #tpu.memory_space<vmem>>, vector<1x8x32xf32>
      %75 = vector.shape_cast %74 : vector<1x8x32xf32> to vector<8x32xf32>
      %cst_45 = arith.constant dense<0.000000e+00> : vector<8xf32>
      %76 = vector.multi_reduction <add>, %75, %cst_45 [1] : vector<8x32xf32> to vector<8xf32>
      %77 = vector.shape_cast %76 : vector<8xf32> to vector<8x1xf32>
      %cst_46 = arith.constant 3.200000e+01 : f32
      %78 = vector.broadcast %cst_46 : f32 to vector<8x1xf32>
      %79 = arith.divf %77, %78 : vector<8x1xf32>
      %80 = vector.broadcast %79 : vector<8x1xf32> to vector<8x32xf32>
      %81 = arith.subf %75, %80 : vector<8x32xf32>
      %82 = arith.mulf %81, %81 : vector<8x32xf32>
      %cst_47 = arith.constant dense<0.000000e+00> : vector<8xf32>
      %83 = vector.multi_reduction <add>, %82, %cst_47 [1] : vector<8x32xf32> to vector<8xf32>
      %84 = vector.shape_cast %83 : vector<8xf32> to vector<8x1xf32>
      %cst_48 = arith.constant 3.200000e+01 : f32
      %85 = vector.broadcast %cst_48 : f32 to vector<8x1xf32>
      %86 = arith.divf %84, %85 : vector<8x1xf32>
      %87 = vector.broadcast %79 : vector<8x1xf32> to vector<8x32xf32>
      %88 = arith.subf %75, %87 : vector<8x32xf32>
      %cst_49 = arith.constant 9.99999974E-6 : f32
      %89 = vector.broadcast %cst_49 : f32 to vector<8x1xf32>
      %90 = arith.addf %86, %89 : vector<8x1xf32>
      %91 = math.rsqrt %90 : vector<8x1xf32>
      %92 = vector.broadcast %91 : vector<8x1xf32> to vector<8x32xf32>
      %93 = arith.mulf %88, %92 : vector<8x32xf32>
      %94 = vector.broadcast %0 : vector<1x32xf32> to vector<8x32xf32>
      %95 = arith.mulf %93, %94 : vector<8x32xf32>
      %96 = vector.broadcast %1 : vector<1x32xf32> to vector<8x32xf32>
      %97 = arith.addf %95, %96 : vector<8x32xf32>
      %c0_50 = arith.constant 0 : index
      %c0_51 = arith.constant 0 : index
      %98 = vector.load %arg6[%c0_50, %c0_51] : memref<32x32xf32, #tpu.memory_space<vmem>>, vector<32x32xf32>
      %cst_52 = arith.constant dense<0.000000e+00> : vector<8x32xf32>
      %99 = tpu.matmul %75, %98, %cst_52 {dimension_numbers = #tpu.dot_dimension_numbers<[1], [0], [0], [1], [0, 0, 1, 1], [], []>} : vector<8x32xf32>, vector<32x32xf32>, vector<8x32xf32> -> vector<8x32xf32>
      %c0_53 = arith.constant 0 : index
      %c0_54 = arith.constant 0 : index
      %100 = vector.load %arg7[%c0_53, %c0_54] : memref<1x32xf32, #tpu.memory_space<vmem>>, vector<1x32xf32>
      %101 = vector.broadcast %100 : vector<1x32xf32> to vector<8x32xf32>
      %102 = arith.addf %99, %101 : vector<8x32xf32>
      %c0_55 = arith.constant 0 : index
      %c0_56 = arith.constant 0 : index
      %103 = vector.load %arg23[%c0_55, %c0_56] : memref<8x32xf32, #tpu.memory_space<vmem>>, vector<8x32xf32>
      tpu.vector_store %arg23[%c0_55, %c0_56], %102 {strides = array<i32>} : memref<8x32xf32, #tpu.memory_space<vmem>>, vector<8x32xf32>,
      %c0_57 = arith.constant 0 : index
      %c0_58 = arith.constant 0 : index
      %104 = vector.load %arg8[%c0_57, %c0_58] : memref<32x64xf32, #tpu.memory_space<vmem>>, vector<32x64xf32>
      %cst_59 = arith.constant dense<0.000000e+00> : vector<8x64xf32>
      %105 = tpu.matmul %97, %104, %cst_59 {dimension_numbers = #tpu.dot_dimension_numbers<[1], [0], [0], [1], [0, 0, 1, 1], [], []>} : vector<8x32xf32>, vector<32x64xf32>, vector<8x64xf32> -> vector<8x64xf32>
      %c0_60 = arith.constant 0 : index
      %c0_61 = arith.constant 0 : index
      %106 = vector.load %arg9[%c0_60, %c0_61] : memref<1x64xf32, #tpu.memory_space<vmem>>, vector<1x64xf32>
      %107 = vector.broadcast %106 : vector<1x64xf32> to vector<8x64xf32>
      %108 = arith.addf %105, %107 : vector<8x64xf32>
      %109 = vector.extract_strided_slice %108 {offsets = [0, 0], sizes = [8, 32], strides = [1, 1]} : vector<8x64xf32> to vector<8x32xf32>
      %110 = vector.extract_strided_slice %108 {offsets = [0, 32], sizes = [8, 32], strides = [1, 1]} : vector<8x64xf32> to vector<8x32xf32>
      %111 = arith.mulf %109, %102 : vector<8x32xf32>
      %cst_62 = arith.constant dense<0.000000e+00> : vector<8x8xf32>
      %112 = tpu.matmul %111, %2, %cst_62 {dimension_numbers = #tpu.dot_dimension_numbers<[1], [0], [0], [1], [0, 0, 1, 1], [], []>} : vector<8x32xf32>, vector<32x8xf32>, vector<8x8xf32> -> vector<8x8xf32>
      %c0_63 = arith.constant 0 : index
      %c0_64 = arith.constant 0 : index
      %113 = vector.load %arg24[%c0_63, %c0_64] : memref<8x8xf32, #tpu.memory_space<vmem>>, vector<8x8xf32>
      tpu.vector_store %arg24[%c0_63, %c0_64], %112 {strides = array<i32>} : memref<8x8xf32, #tpu.memory_space<vmem>>, vector<8x8xf32>,
      %cst_65 = arith.constant 1.000000e+00 : f32
      %114 = vector.broadcast %cst_65 : f32 to vector<8x8xf32>
      %c0_66 = arith.constant 0 : index
      %c0_67 = arith.constant 0 : index
      %115 = vector.load %arg25[%c0_66, %c0_67] : memref<8x8xf32, #tpu.memory_space<vmem>>, vector<8x8xf32>
      tpu.vector_store %arg25[%c0_66, %c0_67], %114 {strides = array<i32>} : memref<8x8xf32, #tpu.memory_space<vmem>>, vector<8x8xf32>,
      %c0_68 = arith.constant 0 : index
      %c0_69 = arith.constant 0 : index
      %116 = vector.load %arg26[%c0_68, %c0_69] : memref<8x32xf32, #tpu.memory_space<vmem>>, vector<8x32xf32>
      tpu.vector_store %arg26[%c0_68, %c0_69], %110 {strides = array<i32>} : memref<8x32xf32, #tpu.memory_space<vmem>>, vector<8x32xf32>,
    } else {
    }
    %c0_8 = arith.constant 0 : index
    %c0_9 = arith.constant 0 : index
    %c0_10 = arith.constant 0 : index
    %7 = vector.load %arg2[%c0_8, %c0_9, %c0_10] : memref<8x8x32xf32, #tpu.memory_space<vmem>>, vector<8x8x32xf32>
    %8 = vector.shape_cast %7 : vector<8x8x32xf32> to vector<64x32xf32>
    %cst = arith.constant dense<0.000000e+00> : vector<64xf32>
    %9 = vector.multi_reduction <add>, %8, %cst [1] : vector<64x32xf32> to vector<64xf32>
    %10 = vector.shape_cast %9 : vector<64xf32> to vector<64x1xf32>
    %cst_11 = arith.constant 3.200000e+01 : f32
    %11 = vector.broadcast %cst_11 : f32 to vector<64x1xf32>
    %12 = arith.divf %10, %11 : vector<64x1xf32>
    %13 = vector.broadcast %12 : vector<64x1xf32> to vector<64x32xf32>
    %14 = arith.subf %8, %13 : vector<64x32xf32>
    %15 = arith.mulf %14, %14 : vector<64x32xf32>
    %cst_12 = arith.constant dense<0.000000e+00> : vector<64xf32>
    %16 = vector.multi_reduction <add>, %15, %cst_12 [1] : vector<64x32xf32> to vector<64xf32>
    %17 = vector.shape_cast %16 : vector<64xf32> to vector<64x1xf32>
    %cst_13 = arith.constant 3.200000e+01 : f32
    %18 = vector.broadcast %cst_13 : f32 to vector<64x1xf32>
    %19 = arith.divf %17, %18 : vector<64x1xf32>
    %20 = vector.broadcast %12 : vector<64x1xf32> to vector<64x32xf32>
    %21 = arith.subf %8, %20 : vector<64x32xf32>
    %cst_14 = arith.constant 9.99999974E-6 : f32
    %22 = vector.broadcast %cst_14 : f32 to vector<64x1xf32>
    %23 = arith.addf %19, %22 : vector<64x1xf32>
    %24 = math.rsqrt %23 : vector<64x1xf32>
    %25 = vector.broadcast %24 : vector<64x1xf32> to vector<64x32xf32>
    %26 = arith.mulf %21, %25 : vector<64x32xf32>
    %27 = vector.broadcast %0 : vector<1x32xf32> to vector<64x32xf32>
    %28 = arith.mulf %26, %27 : vector<64x32xf32>
    %29 = vector.broadcast %1 : vector<1x32xf32> to vector<64x32xf32>
    %30 = arith.addf %28, %29 : vector<64x32xf32>
    %c0_15 = arith.constant 0 : index
    %c0_16 = arith.constant 0 : index
    %31 = vector.load %arg8[%c0_15, %c0_16] : memref<32x64xf32, #tpu.memory_space<vmem>>, vector<32x64xf32>
    %cst_17 = arith.constant dense<0.000000e+00> : vector<64x64xf32>
    %32 = tpu.matmul %30, %31, %cst_17 {dimension_numbers = #tpu.dot_dimension_numbers<[1], [0], [0], [1], [0, 0, 1, 1], [], []>} : vector<64x32xf32>, vector<32x64xf32>, vector<64x64xf32> -> vector<64x64xf32>
    %c0_18 = arith.constant 0 : index
    %c0_19 = arith.constant 0 : index
    %33 = vector.load %arg9[%c0_18, %c0_19] : memref<1x64xf32, #tpu.memory_space<vmem>>, vector<1x64xf32>
    %34 = vector.broadcast %33 : vector<1x64xf32> to vector<64x64xf32>
    %35 = arith.addf %32, %34 : vector<64x64xf32>
    %36 = vector.extract_strided_slice %35 {offsets = [0, 0], sizes = [64, 32], strides = [1, 1]} : vector<64x64xf32> to vector<64x32xf32>
    %37 = vector.extract_strided_slice %35 {offsets = [0, 32], sizes = [64, 32], strides = [1, 1]} : vector<64x64xf32> to vector<64x32xf32>
    %c0_20 = arith.constant 0 : index
    %c0_21 = arith.constant 0 : index
    %38 = vector.load %arg23[%c0_20, %c0_21] : memref<8x32xf32, #tpu.memory_space<vmem>>, vector<8x32xf32>
    %39 = vector.shape_cast %36 : vector<64x32xf32> to vector<8x8x32xf32>
    %40 = vector.shape_cast %38 : vector<8x32xf32> to vector<1x8x32xf32>
    %41 = vector.broadcast %40 : vector<1x8x32xf32> to vector<8x8x32xf32>
    %42 = arith.mulf %39, %41 : vector<8x8x32xf32>
    %43 = vector.shape_cast %42 : vector<8x8x32xf32> to vector<64x32xf32>
    %cst_22 = arith.constant dense<0.000000e+00> : vector<64x8xf32>
    %44 = tpu.matmul %43, %2, %cst_22 {dimension_numbers = #tpu.dot_dimension_numbers<[1], [0], [0], [1], [0, 0, 1, 1], [], []>} : vector<64x32xf32>, vector<32x8xf32>, vector<64x8xf32> -> vector<64x8xf32>
    %45 = vector.shape_cast %44 : vector<64x8xf32> to vector<8x8x8xf32>
    %c0_23 = arith.constant 0 : index
    %c0_24 = arith.constant 0 : index
    %46 = vector.load %arg24[%c0_23, %c0_24] : memref<8x8xf32, #tpu.memory_space<vmem>>, vector<8x8xf32>
    %cst_25 = arith.constant dense<0xFF800000> : vector<8x8xf32>
    %47 = vector.multi_reduction <maximumf>, %45, %cst_25 [0] : vector<8x8x8xf32> to vector<8x8xf32>
    %48 = arith.maximumf %46, %47 : vector<8x8xf32>
    %49 = arith.subf %46, %48 : vector<8x8xf32>
    %50 = math.exp %49 : vector<8x8xf32>
    %51 = vector.shape_cast %48 : vector<8x8xf32> to vector<1x8x8xf32>
    %52 = vector.broadcast %51 : vector<1x8x8xf32> to vector<8x8x8xf32>
    %53 = arith.subf %45, %52 : vector<8x8x8xf32>
    %54 = math.exp %53 : vector<8x8x8xf32>
    %c0_26 = arith.constant 0 : index
    %c0_27 = arith.constant 0 : index
    %55 = vector.load %arg25[%c0_26, %c0_27] : memref<8x8xf32, #tpu.memory_space<vmem>>, vector<8x8xf32>
    %56 = arith.mulf %50, %55 : vector<8x8xf32>
    %cst_28 = arith.constant dense<0.000000e+00> : vector<8x8xf32>
    %57 = vector.multi_reduction <add>, %54, %cst_28 [0] : vector<8x8x8xf32> to vector<8x8xf32>
    %58 = arith.addf %56, %57 : vector<8x8xf32>
    %c0_29 = arith.constant 0 : index
    %c0_30 = arith.constant 0 : index
    %59 = vector.load %arg25[%c0_29, %c0_30] : memref<8x8xf32, #tpu.memory_space<vmem>>, vector<8x8xf32>
    tpu.vector_store %arg25[%c0_29, %c0_30], %58 {strides = array<i32>} : memref<8x8xf32, #tpu.memory_space<vmem>>, vector<8x8xf32>,
    %60 = vector.shape_cast %54 : vector<8x8x8xf32> to vector<64x8xf32>
    %cst_31 = arith.constant dense<0.000000e+00> : vector<64x32xf32>
    %61 = tpu.matmul %60, %3, %cst_31 {dimension_numbers = #tpu.dot_dimension_numbers<[1], [0], [0], [1], [0, 0, 1, 1], [], []>} : vector<64x8xf32>, vector<8x32xf32>, vector<64x32xf32> -> vector<64x32xf32>
    %62 = arith.mulf %61, %37 : vector<64x32xf32>
    %63 = vector.shape_cast %62 : vector<64x32xf32> to vector<8x8x32xf32>
    %cst_32 = arith.constant dense<0.000000e+00> : vector<8x32xf32>
    %64 = vector.multi_reduction <add>, %63, %cst_32 [0] : vector<8x8x32xf32> to vector<8x32xf32>
    %cst_33 = arith.constant dense<0.000000e+00> : vector<8x32xf32>
    %65 = tpu.matmul %50, %3, %cst_33 {dimension_numbers = #tpu.dot_dimension_numbers<[1], [0], [0], [1], [0, 0, 1, 1], [], []>} : vector<8x8xf32>, vector<8x32xf32>, vector<8x32xf32> -> vector<8x32xf32>
    %c0_34 = arith.constant 0 : index
    %c0_35 = arith.constant 0 : index
    %66 = vector.load %arg26[%c0_34, %c0_35] : memref<8x32xf32, #tpu.memory_space<vmem>>, vector<8x32xf32>
    %67 = arith.mulf %65, %66 : vector<8x32xf32>
    %68 = arith.addf %67, %64 : vector<8x32xf32>
    %c0_36 = arith.constant 0 : index
    %c0_37 = arith.constant 0 : index
    %69 = vector.load %arg26[%c0_36, %c0_37] : memref<8x32xf32, #tpu.memory_space<vmem>>, vector<8x32xf32>
    tpu.vector_store %arg26[%c0_36, %c0_37], %68 {strides = array<i32>} : memref<8x32xf32, #tpu.memory_space<vmem>>, vector<8x32xf32>,
    %c0_38 = arith.constant 0 : index
    %c0_39 = arith.constant 0 : index
    %70 = vector.load %arg24[%c0_38, %c0_39] : memref<8x8xf32, #tpu.memory_space<vmem>>, vector<8x8xf32>
    tpu.vector_store %arg24[%c0_38, %c0_39], %48 {strides = array<i32>} : memref<8x8xf32, #tpu.memory_space<vmem>>, vector<8x8xf32>,
    %c0_i32_40 = arith.constant 0 : i32
    %71 = arith.cmpi eq, %arg1, %c0_i32_40 : i32
    %72 = arith.extui %71 : i1 to i32
    %c0_i32_41 = arith.constant 0 : i32
    %73 = arith.cmpi ne, %72, %c0_i32_41 : i32
    scf.if %73 {
      %c0_42 = arith.constant 0 : index
      %c0_43 = arith.constant 0 : index
      %c0_44 = arith.constant 0 : index
      %74 = vector.load %arg3[%c0_42, %c0_43, %c0_44] : memref<1x8x32xf32, #tpu.memory_space<vmem>>, vector<1x8x32xf32>
      %75 = vector.shape_cast %74 : vector<1x8x32xf32> to vector<8x32xf32>
      %c0_45 = arith.constant 0 : index
      %c0_46 = arith.constant 0 : index
      %76 = vector.load %arg25[%c0_45, %c0_46] : memref<8x8xf32, #tpu.memory_space<vmem>>, vector<8x8xf32>
      %77 = tpu.reciprocal %76 {approx = true} : vector<8x8xf32> -> vector<8x8xf32>
      %78 = arith.mulf %76, %77 : vector<8x8xf32>
      %cst_47 = arith.constant 2.000000e+00 : f32
      %79 = vector.broadcast %cst_47 : f32 to vector<8x8xf32>
      %80 = arith.subf %79, %78 : vector<8x8xf32>
      %81 = arith.mulf %77, %80 : vector<8x8xf32>
      %cst_48 = arith.constant dense<0.000000e+00> : vector<8x32xf32>
      %82 = tpu.matmul %81, %3, %cst_48 {dimension_numbers = #tpu.dot_dimension_numbers<[1], [0], [0], [1], [0, 0, 1, 1], [], []>} : vector<8x8xf32>, vector<8x32xf32>, vector<8x32xf32> -> vector<8x32xf32>
      %c0_49 = arith.constant 0 : index
      %c0_50 = arith.constant 0 : index
      %83 = vector.load %arg26[%c0_49, %c0_50] : memref<8x32xf32, #tpu.memory_space<vmem>>, vector<8x32xf32>
      %84 = arith.mulf %83, %82 : vector<8x32xf32>
      %c0_51 = arith.constant 0 : index
      %c0_52 = arith.constant 0 : index
      %85 = vector.load %arg10[%c0_51, %c0_52] : memref<32x32xf32, #tpu.memory_space<vmem>>, vector<32x32xf32>
      %cst_53 = arith.constant dense<0.000000e+00> : vector<8x32xf32>
      %86 = tpu.matmul %84, %85, %cst_53 {dimension_numbers = #tpu.dot_dimension_numbers<[1], [0], [0], [1], [0, 0, 1, 1], [], []>} : vector<8x32xf32>, vector<32x32xf32>, vector<8x32xf32> -> vector<8x32xf32>
      %c0_54 = arith.constant 0 : index
      %c0_55 = arith.constant 0 : index
      %87 = vector.load %arg11[%c0_54, %c0_55] : memref<1x32xf32, #tpu.memory_space<vmem>>, vector<1x32xf32>
      %88 = vector.broadcast %87 : vector<1x32xf32> to vector<8x32xf32>
      %89 = arith.addf %86, %88 : vector<8x32xf32>
      %c0_56 = arith.constant 0 : index
      %c0_57 = arith.constant 0 : index
      %90 = vector.load %arg12[%c0_56, %c0_57] : memref<1x32xf32, #tpu.memory_space<vmem>>, vector<1x32xf32>
      %c0_58 = arith.constant 0 : index
      %c0_59 = arith.constant 0 : index
      %91 = vector.load %arg13[%c0_58, %c0_59] : memref<1x32xf32, #tpu.memory_space<vmem>>, vector<1x32xf32>
      %cst_60 = arith.constant dense<0.000000e+00> : vector<8xf32>
      %92 = vector.multi_reduction <add>, %89, %cst_60 [1] : vector<8x32xf32> to vector<8xf32>
      %93 = vector.shape_cast %92 : vector<8xf32> to vector<8x1xf32>
      %cst_61 = arith.constant 3.200000e+01 : f32
      %94 = vector.broadcast %cst_61 : f32 to vector<8x1xf32>
      %95 = arith.divf %93, %94 : vector<8x1xf32>
      %96 = vector.broadcast %95 : vector<8x1xf32> to vector<8x32xf32>
      %97 = arith.subf %89, %96 : vector<8x32xf32>
      %98 = arith.mulf %97, %97 : vector<8x32xf32>
      %cst_62 = arith.constant dense<0.000000e+00> : vector<8xf32>
      %99 = vector.multi_reduction <add>, %98, %cst_62 [1] : vector<8x32xf32> to vector<8xf32>
      %100 = vector.shape_cast %99 : vector<8xf32> to vector<8x1xf32>
      %cst_63 = arith.constant 3.200000e+01 : f32
      %101 = vector.broadcast %cst_63 : f32 to vector<8x1xf32>
      %102 = arith.divf %100, %101 : vector<8x1xf32>
      %103 = vector.broadcast %95 : vector<8x1xf32> to vector<8x32xf32>
      %104 = arith.subf %89, %103 : vector<8x32xf32>
      %cst_64 = arith.constant 9.99999974E-6 : f32
      %105 = vector.broadcast %cst_64 : f32 to vector<8x1xf32>
      %106 = arith.addf %102, %105 : vector<8x1xf32>
      %107 = math.rsqrt %106 : vector<8x1xf32>
      %108 = vector.broadcast %107 : vector<8x1xf32> to vector<8x32xf32>
      %109 = arith.mulf %104, %108 : vector<8x32xf32>
      %110 = vector.broadcast %90 : vector<1x32xf32> to vector<8x32xf32>
      %111 = arith.mulf %109, %110 : vector<8x32xf32>
      %112 = vector.broadcast %91 : vector<1x32xf32> to vector<8x32xf32>
      %113 = arith.addf %111, %112 : vector<8x32xf32>
      %114 = arith.addf %75, %113 : vector<8x32xf32>
      %c0_65 = arith.constant 0 : index
      %c0_66 = arith.constant 0 : index
      %115 = vector.load %arg14[%c0_65, %c0_66] : memref<32x64xf32, #tpu.memory_space<vmem>>, vector<32x64xf32>
      %cst_67 = arith.constant dense<0.000000e+00> : vector<8x64xf32>
      %116 = tpu.matmul %114, %115, %cst_67 {dimension_numbers = #tpu.dot_dimension_numbers<[1], [0], [0], [1], [0, 0, 1, 1], [], []>} : vector<8x32xf32>, vector<32x64xf32>, vector<8x64xf32> -> vector<8x64xf32>
      %c0_68 = arith.constant 0 : index
      %c0_69 = arith.constant 0 : index
      %117 = vector.load %arg15[%c0_68, %c0_69] : memref<1x64xf32, #tpu.memory_space<vmem>>, vector<1x64xf32>
      %118 = vector.broadcast %117 : vector<1x64xf32> to vector<8x64xf32>
      %119 = arith.addf %116, %118 : vector<8x64xf32>
      %cst_70 = arith.constant 0.000000e+00 : f32
      %120 = vector.broadcast %cst_70 : f32 to vector<8x64xf32>
      %121 = arith.maximumf %119, %120 : vector<8x64xf32>
      %c0_71 = arith.constant 0 : index
      %c0_72 = arith.constant 0 : index
      %122 = vector.load %arg16[%c0_71, %c0_72] : memref<1x64xf32, #tpu.memory_space<vmem>>, vector<1x64xf32>
      %c0_73 = arith.constant 0 : index
      %c0_74 = arith.constant 0 : index
      %123 = vector.load %arg17[%c0_73, %c0_74] : memref<1x64xf32, #tpu.memory_space<vmem>>, vector<1x64xf32>
      %cst_75 = arith.constant dense<0.000000e+00> : vector<8xf32>
      %124 = vector.multi_reduction <add>, %121, %cst_75 [1] : vector<8x64xf32> to vector<8xf32>
      %125 = vector.shape_cast %124 : vector<8xf32> to vector<8x1xf32>
      %cst_76 = arith.constant 6.400000e+01 : f32
      %126 = vector.broadcast %cst_76 : f32 to vector<8x1xf32>
      %127 = arith.divf %125, %126 : vector<8x1xf32>
      %128 = vector.broadcast %127 : vector<8x1xf32> to vector<8x64xf32>
      %129 = arith.subf %121, %128 : vector<8x64xf32>
      %130 = arith.mulf %129, %129 : vector<8x64xf32>
      %cst_77 = arith.constant dense<0.000000e+00> : vector<8xf32>
      %131 = vector.multi_reduction <add>, %130, %cst_77 [1] : vector<8x64xf32> to vector<8xf32>
      %132 = vector.shape_cast %131 : vector<8xf32> to vector<8x1xf32>
      %cst_78 = arith.constant 6.400000e+01 : f32
      %133 = vector.broadcast %cst_78 : f32 to vector<8x1xf32>
      %134 = arith.divf %132, %133 : vector<8x1xf32>
      %135 = vector.broadcast %127 : vector<8x1xf32> to vector<8x64xf32>
      %136 = arith.subf %121, %135 : vector<8x64xf32>
      %cst_79 = arith.constant 9.99999974E-6 : f32
      %137 = vector.broadcast %cst_79 : f32 to vector<8x1xf32>
      %138 = arith.addf %134, %137 : vector<8x1xf32>
      %139 = math.rsqrt %138 : vector<8x1xf32>
      %140 = vector.broadcast %139 : vector<8x1xf32> to vector<8x64xf32>
      %141 = arith.mulf %136, %140 : vector<8x64xf32>
      %142 = vector.broadcast %122 : vector<1x64xf32> to vector<8x64xf32>
      %143 = arith.mulf %141, %142 : vector<8x64xf32>
      %144 = vector.broadcast %123 : vector<1x64xf32> to vector<8x64xf32>
      %145 = arith.addf %143, %144 : vector<8x64xf32>
      %c0_80 = arith.constant 0 : index
      %c0_81 = arith.constant 0 : index
      %146 = vector.load %arg18[%c0_80, %c0_81] : memref<64x32xf32, #tpu.memory_space<vmem>>, vector<64x32xf32>
      %cst_82 = arith.constant dense<0.000000e+00> : vector<8x32xf32>
      %147 = tpu.matmul %145, %146, %cst_82 {dimension_numbers = #tpu.dot_dimension_numbers<[1], [0], [0], [1], [0, 0, 1, 1], [], []>} : vector<8x64xf32>, vector<64x32xf32>, vector<8x32xf32> -> vector<8x32xf32>
      %c0_83 = arith.constant 0 : index
      %c0_84 = arith.constant 0 : index
      %148 = vector.load %arg19[%c0_83, %c0_84] : memref<1x32xf32, #tpu.memory_space<vmem>>, vector<1x32xf32>
      %149 = vector.broadcast %148 : vector<1x32xf32> to vector<8x32xf32>
      %150 = arith.addf %147, %149 : vector<8x32xf32>
      %151 = arith.addf %114, %150 : vector<8x32xf32>
      %c0_85 = arith.constant 0 : index
      %c0_86 = arith.constant 0 : index
      %152 = vector.load %arg22[%c0_85, %c0_86] : memref<8x32xf32, #tpu.memory_space<vmem>>, vector<8x32xf32>
      tpu.vector_store %arg22[%c0_85, %c0_86], %151 {strides = array<i32>} : memref<8x32xf32, #tpu.memory_space<vmem>>, vector<8x32xf32>,
    } else {
    }
    return
  }
  func.func @transform_0(%arg0: i32, %arg1: i32) -> (i32, i32, i32) {
    %c0_i32 = arith.constant 0 : i32
    %c0_i32_0 = arith.constant 0 : i32
    return %arg1, %arg0, %c0_i32 : i32, i32, i32
  }
  func.func @transform_1(%arg0: i32, %arg1: i32) -> (i32, i32, i32) {
    %c0_i32 = arith.constant 0 : i32
    %c0_i32_0 = arith.constant 0 : i32
    %c0_i32_1 = arith.constant 0 : i32
    return %c0_i32, %arg0, %c0_i32_0 : i32, i32, i32
  }
  func.func @transform_2(%arg0: i32, %arg1: i32) -> (i32, i32) {
    %c0_i32 = arith.constant 0 : i32
    %c0_i32_0 = arith.constant 0 : i32
    %c0_i32_1 = arith.constant 0 : i32
    return %c0_i32, %c0_i32_0 : i32, i32
  }
  func.func @transform_3(%arg0: i32, %arg1: i32) -> (i32, i32) {
    %c0_i32 = arith.constant 0 : i32
    %c0_i32_0 = arith.constant 0 : i32
    %c0_i32_1 = arith.constant 0 : i32
    return %c0_i32, %c0_i32_0 : i32, i32
  }
  func.func @transform_4(%arg0: i32, %arg1: i32) -> (i32, i32) {
    %c0_i32 = arith.constant 0 : i32
    %c0_i32_0 = arith.constant 0 : i32
    %c0_i32_1 = arith.constant 0 : i32
    return %c0_i32, %c0_i32_0 : i32, i32
  }
  func.func @transform_5(%arg0: i32, %arg1: i32) -> (i32, i32) {
    %c0_i32 = arith.constant 0 : i32
    %c0_i32_0 = arith.constant 0 : i32
    %c0_i32_1 = arith.constant 0 : i32
    return %c0_i32, %c0_i32_0 : i32, i32
  }
  func.func @transform_6(%arg0: i32, %arg1: i32) -> (i32, i32) {
    %c0_i32 = arith.constant 0 : i32
    %c0_i32_0 = arith.constant 0 : i32
    %c0_i32_1 = arith.constant 0 : i32
    return %c0_i32, %c0_i32_0 : i32, i32
  }
  func.func @transform_7(%arg0: i32, %arg1: i32) -> (i32, i32) {
    %c0_i32 = arith.constant 0 : i32
    %c0_i32_0 = arith.constant 0 : i32
    %c0_i32_1 = arith.constant 0 : i32
    return %c0_i32, %c0_i32_0 : i32, i32
  }
  func.func @transform_8(%arg0: i32, %arg1: i32) -> (i32, i32) {
    %c0_i32 = arith.constant 0 : i32
    %c0_i32_0 = arith.constant 0 : i32
    %c0_i32_1 = arith.constant 0 : i32
    return %c0_i32, %c0_i32_0 : i32, i32
  }
  func.func @transform_9(%arg0: i32, %arg1: i32) -> (i32, i32) {
    %c0_i32 = arith.constant 0 : i32
    %c0_i32_0 = arith.constant 0 : i32
    %c0_i32_1 = arith.constant 0 : i32
    return %c0_i32, %c0_i32_0 : i32, i32
  }
  func.func @transform_10(%arg0: i32, %arg1: i32) -> (i32, i32) {
    %c0_i32 = arith.constant 0 : i32
    %c0_i32_0 = arith.constant 0 : i32
    %c0_i32_1 = arith.constant 0 : i32
    return %c0_i32, %c0_i32_0 : i32, i32
  }
  func.func @transform_11(%arg0: i32, %arg1: i32) -> (i32, i32) {
    %c0_i32 = arith.constant 0 : i32
    %c0_i32_0 = arith.constant 0 : i32
    %c0_i32_1 = arith.constant 0 : i32
    return %c0_i32, %c0_i32_0 : i32, i32
  }
  func.func @transform_12(%arg0: i32, %arg1: i32) -> (i32, i32) {
    %c0_i32 = arith.constant 0 : i32
    %c0_i32_0 = arith.constant 0 : i32
    %c0_i32_1 = arith.constant 0 : i32
    return %c0_i32, %c0_i32_0 : i32, i32
  }
  func.func @transform_13(%arg0: i32, %arg1: i32) -> (i32, i32) {
    %c0_i32 = arith.constant 0 : i32
    %c0_i32_0 = arith.constant 0 : i32
    %c0_i32_1 = arith.constant 0 : i32
    return %c0_i32, %c0_i32_0 : i32, i32
  }
  func.func @transform_14(%arg0: i32, %arg1: i32) -> (i32, i32) {
    %c0_i32 = arith.constant 0 : i32
    %c0_i32_0 = arith.constant 0 : i32
    %c0_i32_1 = arith.constant 0 : i32
    return %c0_i32, %c0_i32_0 : i32, i32
  }
  func.func @transform_15(%arg0: i32, %arg1: i32) -> (i32, i32) {
    %c0_i32 = arith.constant 0 : i32
    %c0_i32_0 = arith.constant 0 : i32
    %c0_i32_1 = arith.constant 0 : i32
    return %c0_i32, %c0_i32_0 : i32, i32
  }
  func.func @transform_16(%arg0: i32, %arg1: i32) -> (i32, i32) {
    %c0_i32 = arith.constant 0 : i32
    %c0_i32_0 = arith.constant 0 : i32
    %c0_i32_1 = arith.constant 0 : i32
    return %c0_i32, %c0_i32_0 : i32, i32
  }
  func.func @transform_17(%arg0: i32, %arg1: i32) -> (i32, i32) {
    %c0_i32 = arith.constant 0 : i32
    %c0_i32_0 = arith.constant 0 : i32
    %c0_i32_1 = arith.constant 0 : i32
    return %c0_i32, %c0_i32_0 : i32, i32
  }
  func.func @transform_18(%arg0: i32, %arg1: i32) -> (i32, i32) {
    %c0_i32 = arith.constant 0 : i32
    %c0_i32_0 = arith.constant 0 : i32
    %c0_i32_1 = arith.constant 0 : i32
    return %c0_i32, %c0_i32_0 : i32, i32
  }
  func.func @transform_19(%arg0: i32, %arg1: i32) -> (i32, i32) {
    %c0_i32 = arith.constant 0 : i32
    %c0_i32_0 = arith.constant 0 : i32
    %c0_i32_1 = arith.constant 0 : i32
    return %c0_i32, %c0_i32_0 : i32, i32
  }
  func.func @transform_20(%arg0: i32, %arg1: i32) -> (i32, i32) {
    %c0_i32 = arith.constant 0 : i32
    %c0_i32_0 = arith.constant 0 : i32
    return %arg0, %c0_i32 : i32, i32
  }
}

</mosaic_0001>

<llo_original>
// kernel: class_block_forward.1
$region0: #{class_block_forward.1}
  #allocation0 [shape = 'u32[]', space=smem, size = 0x4, offset = 0x4, fixed_abs, tag = 'smem constant byte address 0x4 - core index']
  #allocation1 [shape = 'u32[72,128]{1,0:T(1,128)}', space=vmem, size = 0x9000, scoped, tag = 'internal scratch']
  #allocation2 [shape = 'f32[8,32]{1,0:T(8,128)}', space=vmem, size = 0x1000, scoped, tag = 'scratch operand']
  #allocation3 [shape = 'f32[8,8]{1,0:T(8,128)}', space=vmem, size = 0x1000, scoped, tag = 'scratch operand']
  #allocation4 [shape = 'f32[8,8]{1,0:T(8,128)}', space=vmem, size = 0x1000, scoped, tag = 'scratch operand']
  #allocation5 [shape = 'f32[8,32]{1,0:T(8,128)}', space=vmem, size = 0x1000, scoped, tag = 'scratch operand']
  %s0 = inlined_call_operand.vmem [shape: f32[8,8,32], index: 0, kind: input, shape index: {}]
  %s1 = inlined_call_operand.vmem [shape: f32[1,8,32], index: 1, kind: input, shape index: {}]
  %s2 = inlined_call_operand.vmem [shape: f32[1,32], index: 2, kind: input, shape index: {}]
  %s3 = inlined_call_operand.vmem [shape: f32[1,32], index: 3, kind: input, shape index: {}]
  %s4 = inlined_call_operand.vmem [shape: f32[32,32], index: 4, kind: input, shape index: {}]
  %s5 = inlined_call_operand.vmem [shape: f32[1,32], index: 5, kind: input, shape index: {}]
  %s6 = inlined_call_operand.vmem [shape: f32[32,64], index: 6, kind: input, shape index: {}]
  %s7 = inlined_call_operand.vmem [shape: f32[1,64], index: 7, kind: input, shape index: {}]
  %s8 = inlined_call_operand.vmem [shape: f32[32,32], index: 8, kind: input, shape index: {}]
  %s9 = inlined_call_operand.vmem [shape: f32[1,32], index: 9, kind: input, shape index: {}]
  %s10 = inlined_call_operand.vmem [shape: f32[1,32], index: 10, kind: input, shape index: {}]
  %s11 = inlined_call_operand.vmem [shape: f32[1,32], index: 11, kind: input, shape index: {}]
  %s12 = inlined_call_operand.vmem [shape: f32[32,64], index: 12, kind: input, shape index: {}]
  %s13 = inlined_call_operand.vmem [shape: f32[1,64], index: 13, kind: input, shape index: {}]
  %s14 = inlined_call_operand.vmem [shape: f32[1,64], index: 14, kind: input, shape index: {}]
  %s15 = inlined_call_operand.vmem [shape: f32[1,64], index: 15, kind: input, shape index: {}]
  %s16 = inlined_call_operand.vmem [shape: f32[64,32], index: 16, kind: input, shape index: {}]
  %s17 = inlined_call_operand.vmem [shape: f32[1,32], index: 17, kind: input, shape index: {}]
  %s18 = inlined_call_operand.vmem [shape: f32[32,8], index: 18, kind: input, shape index: {}]
  %s19 = inlined_call_operand.vmem [shape: f32[8,32], index: 19, kind: input, shape index: {}]
  %s20 = inlined_call_operand.vmem [shape: f32[8,32], index: 20, kind: output, shape index: {}]
  %s21 = sld [smem:[#allocation0]]
  $region98: #{class_block_forward.1} parent=0
    _
  %s23 = ssub.s32 1, %s21
  %s24 = scalar_select 0, %s23, %s21
  // Predicated region
  $region2: #{class_block_forward.1} parent=0 // pred_check
    _
  $region3: #{class_block_forward.1} parent=0 // pred_check_branch
    %26 = sbr.rel (0) target = $region5
  $region4: #{class_block_forward.1} parent=0 // pred_region
    _
  $region5: #{class_block_forward.1} parent=0 // pred_fallthru
    _
  // Predicated region
  $region6: #{class_block_forward.1} parent=0 // pred_check
    _
  $region7: #{class_block_forward.1} parent=0 // pred_check_branch
    %28 = sbr.rel (0) target = $region9
  $region8: #{class_block_forward.1} parent=0 // pred_region
    _
  $region9: #{class_block_forward.1} parent=0 // pred_fallthru
    _
  // Predicated region
  $region10: #{class_block_forward.1} parent=0 // pred_check
    _
  $region11: #{class_block_forward.1} parent=0 // pred_check_branch
    %30 = sbr.rel (0) target = $region13
  $region12: #{class_block_forward.1} parent=0 // pred_region
    _
  $region13: #{class_block_forward.1} parent=0 // pred_fallthru
    _
  // Predicated region
  $region14: #{class_block_forward.1} parent=0 // pred_check
    _
  $region15: #{class_block_forward.1} parent=0 // pred_check_branch
    %32 = sbr.rel (0) target = $region17
  $region16: #{class_block_forward.1} parent=0 // pred_region
    _
  $region17: #{class_block_forward.1} parent=0 // pred_fallthru
    _
  // Predicated region
  $region18: #{class_block_forward.1} parent=0 // pred_check
    _
  $region19: #{class_block_forward.1} parent=0 // pred_check_branch
    %34 = sbr.rel (0) target = $region21
  $region20: #{class_block_forward.1} parent=0 // pred_region
    _
  $region21: #{class_block_forward.1} parent=0 // pred_fallthru
    _
  // Predicated region
  $region22: #{class_block_forward.1} parent=0 // pred_check
    _
  $region23: #{class_block_forward.1} parent=0 // pred_check_branch
    %36 = sbr.rel (0) target = $region25
  $region24: #{class_block_forward.1} parent=0 // pred_region
    _
  $region25: #{class_block_forward.1} parent=0 // pred_fallthru
    _
  // Predicated region
  $region26: #{class_block_forward.1} parent=0 // pred_check
    _
  $region27: #{class_block_forward.1} parent=0 // pred_check_branch
    %38 = sbr.rel (0) target = $region29
  $region28: #{class_block_forward.1} parent=0 // pred_region
    _
  $region29: #{class_block_forward.1} parent=0 // pred_fallthru
    _
  // Predicated region
  $region30: #{class_block_forward.1} parent=0 // pred_check
    _
  $region31: #{class_block_forward.1} parent=0 // pred_check_branch
    %40 = sbr.rel (0) target = $region33
  $region32: #{class_block_forward.1} parent=0 // pred_region
    _
  $region33: #{class_block_forward.1} parent=0 // pred_fallthru
    _
  // Predicated region
  $region34: #{class_block_forward.1} parent=0 // pred_check
    _
  $region35: #{class_block_forward.1} parent=0 // pred_check_branch
    %42 = sbr.rel (0) target = $region37
  $region36: #{class_block_forward.1} parent=0 // pred_region
    _
  $region37: #{class_block_forward.1} parent=0 // pred_fallthru
    _
  // Predicated region
  $region38: #{class_block_forward.1} parent=0 // pred_check
    _
  $region39: #{class_block_forward.1} parent=0 // pred_check_branch
    %44 = sbr.rel (0) target = $region41
  $region40: #{class_block_forward.1} parent=0 // pred_region
    _
  $region41: #{class_block_forward.1} parent=0 // pred_fallthru
    _
  // Predicated region
  $region42: #{class_block_forward.1} parent=0 // pred_check
    _
  $region43: #{class_block_forward.1} parent=0 // pred_check_branch
    %46 = sbr.rel (0) target = $region45
  $region44: #{class_block_forward.1} parent=0 // pred_region
    _
  $region45: #{class_block_forward.1} parent=0 // pred_fallthru
    _
  // Predicated region
  $region46: #{class_block_forward.1} parent=0 // pred_check
    _
  $region47: #{class_block_forward.1} parent=0 // pred_check_branch
    %48 = sbr.rel (0) target = $region49
  $region48: #{class_block_forward.1} parent=0 // pred_region
    _
  $region49: #{class_block_forward.1} parent=0 // pred_fallthru
    _
  // Predicated region
  $region50: #{class_block_forward.1} parent=0 // pred_check
    _
  $region51: #{class_block_forward.1} parent=0 // pred_check_branch
    %50 = sbr.rel (0) target = $region53
  $region52: #{class_block_forward.1} parent=0 // pred_region
    _
  $region53: #{class_block_forward.1} parent=0 // pred_fallthru
    _
  // Predicated region
  $region54: #{class_block_forward.1} parent=0 // pred_check
    _
  $region55: #{class_block_forward.1} parent=0 // pred_check_branch
    %52 = sbr.rel (0) target = $region57
  $region56: #{class_block_forward.1} parent=0 // pred_region
    _
  $region57: #{class_block_forward.1} parent=0 // pred_fallthru
    _
  // Predicated region
  $region58: #{class_block_forward.1} parent=0 // pred_check
    _
  $region59: #{class_block_forward.1} parent=0 // pred_check_branch
    %54 = sbr.rel (0) target = $region61
  $region60: #{class_block_forward.1} parent=0 // pred_region
    _
  $region61: #{class_block_forward.1} parent=0 // pred_fallthru
    _
  // Predicated region
  $region62: #{class_block_forward.1} parent=0 // pred_check
    _
  $region63: #{class_block_forward.1} parent=0 // pred_check_branch
    %56 = sbr.rel (0) target = $region65
  $region64: #{class_block_forward.1} parent=0 // pred_region
    _
  $region65: #{class_block_forward.1} parent=0 // pred_fallthru
    _
  // Predicated region
  $region66: #{class_block_forward.1} parent=0 // pred_check
    _
  $region67: #{class_block_forward.1} parent=0 // pred_check_branch
    %58 = sbr.rel (0) target = $region69
  $region68: #{class_block_forward.1} parent=0 // pred_region
    _
  $region69: #{class_block_forward.1} parent=0 // pred_fallthru
    _
  // Predicated region
  $region70: #{class_block_forward.1} parent=0 // pred_check
    _
  $region71: #{class_block_forward.1} parent=0 // pred_check_branch
    %60 = sbr.rel (0) target = $region73
  $region72: #{class_block_forward.1} parent=0 // pred_region
    _
  $region73: #{class_block_forward.1} parent=0 // pred_fallthru
    _
  // Predicated region
  $region74: #{class_block_forward.1} parent=0 // pred_check
    _
  $region75: #{class_block_forward.1} parent=0 // pred_check_branch
    %62 = sbr.rel (0) target = $region77
  $region76: #{class_block_forward.1} parent=0 // pred_region
    _
  $region77: #{class_block_forward.1} parent=0 // pred_fallthru
    _
  // Predicated region
  $region78: #{class_block_forward.1} parent=0 // pred_check
    _
  $region79: #{class_block_forward.1} parent=0 // pred_check_branch
    %64 = sbr.rel (0) target = $region81
  $region80: #{class_block_forward.1} parent=0 // pred_region
    _
  $region81: #{class_block_forward.1} parent=0 // pred_fallthru
    _
  %v65 = vld [vmem:[%s2] sm:$0x1]
  %v66 = vld [vmem:[%s3] sm:$0x1]
  %v67 = vld [vmem:[%s18] sm:$0xff]
  %v68 = vld [vmem:[%s18 + $0x8] sm:$0xff]
  %v69 = vld [vmem:[%s18 + $0x10] sm:$0xff]
  %v70 = vld [vmem:[%s18 + $0x18] sm:$0xff]
  %v71 = vld [vmem:[%s19] sm:$0xff]
  %p72 = scmp.eq.s32.totalorder 0, 0
  // Predicated region
  $region82: #{class_block_forward.1} parent=0 // pred_check
    %p73 = pneg %p72
  $region83: #{class_block_forward.1} parent=0 // pred_check_branch
    %75 = sbr.rel (%p73) target = $region85
  $region84: #{class_block_forward.1} parent=0 // pred_region
    %v76 = vld [vmem:[%s1] sm:$0xff]
    %vm77 = vcmask 261120
    %v78 = vsel %vm77, %v76, 0.0
    %79 = vadd.xlane.f32.xlu0 %v78
    %v80 = vpop.xlane.xlu0 %79
    %v81 = vrcp.pop 32.0
    %v82 = vmul.f32 32.0, %v81
    %v83 = vsub.f32 1.0, %v82
    %v84 = vmul.f32 %v81, %v83
    %v85 = vadd.f32 %v81, %v84
    %vm86 = vweird.f32 %v81
    %v87 = vsel %vm86, %v81, %v85
    %v88 = vmul.f32 %v80, %v87
    %v89 = vsub.f32 %v76, %v88
    %v90 = vmul.f32 %v89, %v89
    %v91 = vsel %vm77, %v90, 0.0
    %92 = vadd.xlane.f32.xlu0 %v91
    %v93 = vpop.xlane.xlu0 %92
    %v94 = vmul.f32 %v93, %v87
    %v95 = vadd.f32 %v94, 1e-05
    %v96 = vrsqrt.pop %v95
    %v97 = vmul.f32 %v96, %v95
    %v98 = vmul.f32 %v97, %v96
    %v99 = vmul.f32 0.5, %v98
    %v100 = vsub.f32 1.5, %v99
    %v101 = vmul.f32 %v96, %v100
    %vm102 = vweird.f32 %v95
    %vm103 = vweird.f32 %v96
    %vm104 = vmor %vm102, %vm103
    %v105 = vsel %vm104, %v96, %v101
    %v106 = vmul.f32 %v89, %v105
    %v108 = vperm.slane %v65, 0
    %v110 = vmul.f32 %v106, %v108
    %v112 = vperm.slane %v66, 0
    %v114 = vadd.f32 %v110, %v112
    %v115 = vld [vmem:[%s4] sm:$0xff]
    %v116 = vld [vmem:[%s4 + $0x8] sm:$0xff]
    %v117 = vld [vmem:[%s4 + $0x10] sm:$0xff]
    %v118 = vld [vmem:[%s4 + $0x18] sm:$0xff]
    %v119 = vld [vmem:[%s5] sm:$0x1]
    %v121 = vperm.slane %v119, 0
    %v124 = vsel %vm77, %v76, 0
    %126 = vmatpush.msra.mxu0 0.0
    %127 = vmatpush.msra.mxu0 0.0
    %128 = vmatpush.msra.mxu0 0.0
    %129 = vmatpush.msra.mxu0 0.0
    %130 = vmatpush.msra.mxu0 0.0
    %131 = vmatpush.msra.mxu0 0.0
    %132 = vmatpush.msra.mxu0 0.0
    %133 = vmatpush.msra.mxu0 0.0
    %134 = vmatpush.msra.mxu0 0.0
    %135 = vmatpush.msra.mxu0 0.0
    %136 = vmatpush.msra.mxu0 0.0
    %137 = vmatpush.msra.mxu0 0.0
    %138 = vmatpush.msra.mxu0 %v118
    %139 = vmatpush.msra.mxu0 %v117
    %140 = vmatpush.msra.mxu0 %v116
    %141 = vmatpush.msra.mxu0 %v115
    %142 = vmatmul.f32.gmra.mxu0 %v124
    %v143 = vpop.f32.mrf.mxu0
    %v144 = vadd.f32 %v121, %v143
    %145 = vdwg.mxu0
    %146 = vst.msk [vmem:[#allocation2] sm:$0xff] %vm77, %v144
    %v147 = vld [vmem:[%s6] sm:$0xff]
    %v148 = vld [vmem:[%s6 + $0x8] sm:$0xff]
    %v149 = vld [vmem:[%s6 + $0x10] sm:$0xff]
    %v150 = vld [vmem:[%s6 + $0x18] sm:$0xff]
    %v151 = vld [vmem:[%s7] sm:$0x1]
    %v153 = vperm.slane %v151, 0
    %v156 = vsel %vm77, %v114, 0
    %158 = vmatpush.msra.mxu0 0.0
    %159 = vmatpush.msra.mxu0 0.0
    %160 = vmatpush.msra.mxu0 0.0
    %161 = vmatpush.msra.mxu0 0.0
    %162 = vmatpush.msra.mxu0 0.0
    %163 = vmatpush.msra.mxu0 0.0
    %164 = vmatpush.msra.mxu0 0.0
    %165 = vmatpush.msra.mxu0 0.0
    %166 = vmatpush.msra.mxu0 0.0
    %167 = vmatpush.msra.mxu0 0.0
    %168 = vmatpush.msra.mxu0 0.0
    %169 = vmatpush.msra.mxu0 0.0
    %170 = vmatpush.msra.mxu0 %v150
    %171 = vmatpush.msra.mxu0 %v149
    %172 = vmatpush.msra.mxu0 %v148
    %173 = vmatpush.msra.mxu0 %v147
    %174 = vmatmul.f32.gmra.mxu0 %v156
    %v175 = vpop.f32.mrf.mxu0
    %v176 = vadd.f32 %v153, %v175
    %177 = vdwg.mxu0
    %v178 = vmul.f32 %v176, %v144
    %v180 = vsel %vm77, %v178, 0
    %182 = vmatpush.msra.mxu0 0.0
    %183 = vmatpush.msra.mxu0 0.0
    %184 = vmatpush.msra.mxu0 0.0
    %185 = vmatpush.msra.mxu0 0.0
    %186 = vmatpush.msra.mxu0 0.0
    %187 = vmatpush.msra.mxu0 0.0
    %188 = vmatpush.msra.mxu0 0.0
    %189 = vmatpush.msra.mxu0 0.0
    %190 = vmatpush.msra.mxu0 0.0
    %191 = vmatpush.msra.mxu0 0.0
    %192 = vmatpush.msra.mxu0 0.0
    %193 = vmatpush.msra.mxu0 0.0
    %194 = vmatpush.msra.mxu0 %v70
    %195 = vmatpush.msra.mxu0 %v69
    %196 = vmatpush.msra.mxu0 %v68
    %197 = vmatpush.msra.mxu0 %v67
    %198 = vmatmul.f32.gmra.mxu0 %v180
    %v199 = vpop.f32.mrf.mxu0
    %v200 = vadd.f32 0.0, %v199
    %201 = vdwg.mxu0
    %vm202 = vcmask 64512
    %203 = vst.msk [vmem:[#allocation3] sm:$0xff] %vm202, %v200
    %204 = vst.msk [vmem:[#allocation4] sm:$0xff] %vm202, 1.0
    %206 = vrot.lane.b32.xlu0 %v176, 96
    %v207 = vpop.permute.xlu0 %206
    %209 = vst.msk [vmem:[#allocation5] sm:$0xff] %vm77, %v207
  $region85: #{class_block_forward.1} parent=0 // pred_fallthru
    _
  %v210 = vld [vmem:[%s0] sm:$0xff]
  %v211 = vld [vmem:[%s0 + $0x8] sm:$0xff]
  %v212 = vld [vmem:[%s0 + $0x10] sm:$0xff]
  %v213 = vld [vmem:[%s0 + $0x18] sm:$0xff]
  %v214 = vld [vmem:[%s0 + $0x20] sm:$0xff]
  %v215 = vld [vmem:[%s0 + $0x28] sm:$0xff]
  %v216 = vld [vmem:[%s0 + $0x30] sm:$0xff]
  %v217 = vld [vmem:[%s0 + $0x38] sm:$0xff]
  %vm218 = vcmask 261120
  %v219 = vsel %vm218, %v210, 0.0
  %220 = vadd.xlane.f32.xlu0 %v219
  %v221 = vpop.xlane.xlu0 %220
  %v222 = vsel %vm218, %v211, 0.0
  %223 = vadd.xlane.f32.xlu0 %v222
  %v224 = vpop.xlane.xlu0 %223
  %v225 = vsel %vm218, %v212, 0.0
  %226 = vadd.xlane.f32.xlu0 %v225
  %v227 = vpop.xlane.xlu0 %226
  %v228 = vsel %vm218, %v213, 0.0
  %229 = vadd.xlane.f32.xlu0 %v228
  %v230 = vpop.xlane.xlu0 %229
  %v231 = vsel %vm218, %v214, 0.0
  %232 = vadd.xlane.f32.xlu0 %v231
  %v233 = vpop.xlane.xlu0 %232
  %v234 = vsel %vm218, %v215, 0.0
  %235 = vadd.xlane.f32.xlu0 %v234
  %v236 = vpop.xlane.xlu0 %235
  %v237 = vsel %vm218, %v216, 0.0
  %238 = vadd.xlane.f32.xlu0 %v237
  %v239 = vpop.xlane.xlu0 %238
  %v240 = vsel %vm218, %v217, 0.0
  %241 = vadd.xlane.f32.xlu0 %v240
  %v242 = vpop.xlane.xlu0 %241
  %v243 = vrcp.pop 32.0
  %v244 = vmul.f32 32.0, %v243
  %v245 = vsub.f32 1.0, %v244
  %v246 = vmul.f32 %v243, %v245
  %v247 = vadd.f32 %v243, %v246
  %vm248 = vweird.f32 %v243
  %v249 = vsel %vm248, %v243, %v247
  %v250 = vmul.f32 %v221, %v249
  %v251 = vmul.f32 %v224, %v249
  %v252 = vmul.f32 %v227, %v249
  %v253 = vmul.f32 %v230, %v249
  %v254 = vmul.f32 %v233, %v249
  %v255 = vmul.f32 %v236, %v249
  %v256 = vmul.f32 %v239, %v249
  %v257 = vmul.f32 %v242, %v249
  %v258 = vsub.f32 %v210, %v250
  %v259 = vsub.f32 %v211, %v251
  %v260 = vsub.f32 %v212, %v252
  %v261 = vsub.f32 %v213, %v253
  %v262 = vsub.f32 %v214, %v254
  %v263 = vsub.f32 %v215, %v255
  %v264 = vsub.f32 %v216, %v256
  %v265 = vsub.f32 %v217, %v257
  %v266 = vmul.f32 %v258, %v258
  %v267 = vmul.f32 %v259, %v259
  %v268 = vmul.f32 %v260, %v260
  %v269 = vmul.f32 %v261, %v261
  %v270 = vmul.f32 %v262, %v262
  %v271 = vmul.f32 %v263, %v263
  %v272 = vmul.f32 %v264, %v264
  %v273 = vmul.f32 %v265, %v265
  %v274 = vsel %vm218, %v266, 0.0
  %275 = vadd.xlane.f32.xlu0 %v274
  %v276 = vpop.xlane.xlu0 %275
  %v277 = vsel %vm218, %v267, 0.0
  %278 = vadd.xlane.f32.xlu0 %v277
  %v279 = vpop.xlane.xlu0 %278
  %v280 = vsel %vm218, %v268, 0.0
  %281 = vadd.xlane.f32.xlu0 %v280
  %v282 = vpop.xlane.xlu0 %281
  %v283 = vsel %vm218, %v269, 0.0
  %284 = vadd.xlane.f32.xlu0 %v283
  %v285 = vpop.xlane.xlu0 %284
  %v286 = vsel %vm218, %v270, 0.0
  %287 = vadd.xlane.f32.xlu0 %v286
  %v288 = vpop.xlane.xlu0 %287
  %v289 = vsel %vm218, %v271, 0.0
  %290 = vadd.xlane.f32.xlu0 %v289
  %v291 = vpop.xlane.xlu0 %290
  %v292 = vsel %vm218, %v272, 0.0
  %293 = vadd.xlane.f32.xlu0 %v292
  %v294 = vpop.xlane.xlu0 %293
  %v295 = vsel %vm218, %v273, 0.0
  %296 = vadd.xlane.f32.xlu0 %v295
  %v297 = vpop.xlane.xlu0 %296
  %v298 = vmul.f32 %v276, %v249
  %v299 = vmul.f32 %v279, %v249
  %v300 = vmul.f32 %v282, %v249
  %v301 = vmul.f32 %v285, %v249
  %v302 = vmul.f32 %v288, %v249
  %v303 = vmul.f32 %v291, %v249
  %v304 = vmul.f32 %v294, %v249
  %v305 = vmul.f32 %v297, %v249
  %v306 = vadd.f32 %v298, 1e-05
  %v307 = vadd.f32 %v299, 1e-05
  %v308 = vadd.f32 %v300, 1e-05
  %v309 = vadd.f32 %v301, 1e-05
  %v310 = vadd.f32 %v302, 1e-05
  %v311 = vadd.f32 %v303, 1e-05
  %v312 = vadd.f32 %v304, 1e-05
  %v313 = vadd.f32 %v305, 1e-05
  %v314 = vrsqrt.pop %v306
  %v315 = vmul.f32 %v314, %v306
  %v316 = vmul.f32 %v315, %v314
  %v317 = vmul.f32 0.5, %v316
  %v318 = vsub.f32 1.5, %v317
  %v319 = vmul.f32 %v314, %v318
  %vm320 = vweird.f32 %v306
  %vm321 = vweird.f32 %v314
  %vm322 = vmor %vm320, %vm321
  %v323 = vsel %vm322, %v314, %v319
  %v324 = vrsqrt.pop %v307
  %v325 = vmul.f32 %v324, %v307
  %v326 = vmul.f32 %v325, %v324
  %v327 = vmul.f32 0.5, %v326
  %v328 = vsub.f32 1.5, %v327
  %v329 = vmul.f32 %v324, %v328
  %vm330 = vweird.f32 %v307
  %vm331 = vweird.f32 %v324
  %vm332 = vmor %vm330, %vm331
  %v333 = vsel %vm332, %v324, %v329
  %v334 = vrsqrt.pop %v308
  %v335 = vmul.f32 %v334, %v308
  %v336 = vmul.f32 %v335, %v334
  %v337 = vmul.f32 0.5, %v336
  %v338 = vsub.f32 1.5, %v337
  %v339 = vmul.f32 %v334, %v338
  %vm340 = vweird.f32 %v308
  %vm341 = vweird.f32 %v334
  %vm342 = vmor %vm340, %vm341
  %v343 = vsel %vm342, %v334, %v339
  %v344 = vrsqrt.pop %v309
  %v345 = vmul.f32 %v344, %v309
  %v346 = vmul.f32 %v345, %v344
  %v347 = vmul.f32 0.5, %v346
  %v348 = vsub.f32 1.5, %v347
  %v349 = vmul.f32 %v344, %v348
  %vm350 = vweird.f32 %v309
  %vm351 = vweird.f32 %v344
  %vm352 = vmor %vm350, %vm351
  %v353 = vsel %vm352, %v344, %v349
  %v354 = vrsqrt.pop %v310
  %v355 = vmul.f32 %v354, %v310
  %v356 = vmul.f32 %v355, %v354
  %v357 = vmul.f32 0.5, %v356
  %v358 = vsub.f32 1.5, %v357
  %v359 = vmul.f32 %v354, %v358
  %vm360 = vweird.f32 %v310
  %vm361 = vweird.f32 %v354
  %vm362 = vmor %vm360, %vm361
  %v363 = vsel %vm362, %v354, %v359
  %v364 = vrsqrt.pop %v311
  %v365 = vmul.f32 %v364, %v311
  %v366 = vmul.f32 %v365, %v364
  %v367 = vmul.f32 0.5, %v366
  %v368 = vsub.f32 1.5, %v367
  %v369 = vmul.f32 %v364, %v368
  %vm370 = vweird.f32 %v311
  %vm371 = vweird.f32 %v364
  %vm372 = vmor %vm370, %vm371
  %v373 = vsel %vm372, %v364, %v369
  %v374 = vrsqrt.pop %v312
  %v375 = vmul.f32 %v374, %v312
  %v376 = vmul.f32 %v375, %v374
  %v377 = vmul.f32 0.5, %v376
  %v378 = vsub.f32 1.5, %v377
  %v379 = vmul.f32 %v374, %v378
  %vm380 = vweird.f32 %v312
  %vm381 = vweird.f32 %v374
  %vm382 = vmor %vm380, %vm381
  %v383 = vsel %vm382, %v374, %v379
  %v384 = vrsqrt.pop %v313
  %v385 = vmul.f32 %v384, %v313
  %v386 = vmul.f32 %v385, %v384
  %v387 = vmul.f32 0.5, %v386
  %v388 = vsub.f32 1.5, %v387
  %v389 = vmul.f32 %v384, %v388
  %vm390 = vweird.f32 %v313
  %vm391 = vweird.f32 %v384
  %vm392 = vmor %vm390, %vm391
  %v393 = vsel %vm392, %v384, %v389
  %v394 = vmul.f32 %v258, %v323
  %v395 = vmul.f32 %v259, %v333
  %v396 = vmul.f32 %v260, %v343
  %v397 = vmul.f32 %v261, %v353
  %v398 = vmul.f32 %v262, %v363
  %v399 = vmul.f32 %v263, %v373
  %v400 = vmul.f32 %v264, %v383
  %v401 = vmul.f32 %v265, %v393
  %v403 = vperm.slane %v65, 0
  %v405 = vmul.f32 %v394, %v403
  %v406 = vmul.f32 %v395, %v403
  %v407 = vmul.f32 %v396, %v403
  %v408 = vmul.f32 %v397, %v403
  %v409 = vmul.f32 %v398, %v403
  %v410 = vmul.f32 %v399, %v403
  %v411 = vmul.f32 %v400, %v403
  %v412 = vmul.f32 %v401, %v403
  %v414 = vperm.slane %v66, 0
  %v416 = vadd.f32 %v405, %v414
  %v417 = vadd.f32 %v406, %v414
  %v418 = vadd.f32 %v407, %v414
  %v419 = vadd.f32 %v408, %v414
  %v420 = vadd.f32 %v409, %v414
  %v421 = vadd.f32 %v410, %v414
  %v422 = vadd.f32 %v411, %v414
  %v423 = vadd.f32 %v412, %v414
  %v424 = vld [vmem:[%s6] sm:$0xff]
  %v425 = vld [vmem:[%s6 + $0x8] sm:$0xff]
  %v426 = vld [vmem:[%s6 + $0x10] sm:$0xff]
  %v427 = vld [vmem:[%s6 + $0x18] sm:$0xff]
  %v428 = vld [vmem:[%s7] sm:$0x1]
  %v430 = vperm.slane %v428, 0
  %v433 = vsel %vm218, %v416, 0
  %v436 = vsel %vm218, %v417, 0
  %v439 = vsel %vm218, %v418, 0
  %v442 = vsel %vm218, %v419, 0
  %v445 = vsel %vm218, %v420, 0
  %v448 = vsel %vm218, %v421, 0
  %v451 = vsel %vm218, %v422, 0
  %v454 = vsel %vm218, %v423, 0
  %456 = vmatpush.msra.mxu0 0.0
  %457 = vmatpush.msra.mxu0 0.0
  %458 = vmatpush.msra.mxu0 0.0
  %459 = vmatpush.msra.mxu0 0.0
  %460 = vmatpush.msra.mxu0 0.0
  %461 = vmatpush.msra.mxu0 0.0
  %462 = vmatpush.msra.mxu0 0.0
  %463 = vmatpush.msra.mxu0 0.0
  %464 = vmatpush.msra.mxu0 0.0
  %465 = vmatpush.msra.mxu0 0.0
  %466 = vmatpush.msra.mxu0 0.0
  %467 = vmatpush.msra.mxu0 0.0
  %468 = vmatpush.msra.mxu0 %v427
  %469 = vmatpush.msra.mxu0 %v426
  %470 = vmatpush.msra.mxu0 %v425
  %471 = vmatpush.msra.mxu0 %v424
  %472 = vmatmul.f32.gmra.mxu0 %v433
  %v473 = vpop.f32.mrf.mxu0
  %v474 = vadd.f32 %v430, %v473
  %475 = vmatmul.f32.gmra.mxu0 %v436
  %v476 = vpop.f32.mrf.mxu0
  %v477 = vadd.f32 %v430, %v476
  %478 = vmatmul.f32.gmra.mxu0 %v439
  %v479 = vpop.f32.mrf.mxu0
  %v480 = vadd.f32 %v430, %v479
  %481 = vmatmul.f32.gmra.mxu0 %v442
  %v482 = vpop.f32.mrf.mxu0
  %v483 = vadd.f32 %v430, %v482
  %484 = vmatmul.f32.gmra.mxu0 %v445
  %v485 = vpop.f32.mrf.mxu0
  %v486 = vadd.f32 %v430, %v485
  %487 = vmatmul.f32.gmra.mxu0 %v448
  %v488 = vpop.f32.mrf.mxu0
  %v489 = vadd.f32 %v430, %v488
  %490 = vmatmul.f32.gmra.mxu0 %v451
  %v491 = vpop.f32.mrf.mxu0
  %v492 = vadd.f32 %v430, %v491
  %493 = vmatmul.f32.gmra.mxu0 %v454
  %v494 = vpop.f32.mrf.mxu0
  %v495 = vadd.f32 %v430, %v494
  %496 = vdwg.mxu0
  %v497 = vld [vmem:[#allocation2] sm:$0xff]
  %v498 = vmul.f32 %v474, %v497
  %v499 = vmul.f32 %v477, %v497
  %v500 = vmul.f32 %v480, %v497
  %v501 = vmul.f32 %v483, %v497
  %v502 = vmul.f32 %v486, %v497
  %v503 = vmul.f32 %v489, %v497
  %v504 = vmul.f32 %v492, %v497
  %v505 = vmul.f32 %v495, %v497
  %v507 = vsel %vm218, %v498, 0
  %v510 = vsel %vm218, %v499, 0
  %v513 = vsel %vm218, %v500, 0
  %v516 = vsel %vm218, %v501, 0
  %v519 = vsel %vm218, %v502, 0
  %v522 = vsel %vm218, %v503, 0
  %v525 = vsel %vm218, %v504, 0
  %v528 = vsel %vm218, %v505, 0
  %530 = vmatpush.msra.mxu0 0.0
  %531 = vmatpush.msra.mxu0 0.0
  %532 = vmatpush.msra.mxu0 0.0
  %533 = vmatpush.msra.mxu0 0.0
  %534 = vmatpush.msra.mxu0 0.0
  %535 = vmatpush.msra.mxu0 0.0
  %536 = vmatpush.msra.mxu0 0.0
  %537 = vmatpush.msra.mxu0 0.0
  %538 = vmatpush.msra.mxu0 0.0
  %539 = vmatpush.msra.mxu0 0.0
  %540 = vmatpush.msra.mxu0 0.0
  %541 = vmatpush.msra.mxu0 0.0
  %542 = vmatpush.msra.mxu0 %v70
  %543 = vmatpush.msra.mxu0 %v69
  %544 = vmatpush.msra.mxu0 %v68
  %545 = vmatpush.msra.mxu0 %v67
  %546 = vmatmul.f32.gmra.mxu0 %v507
  %v547 = vpop.f32.mrf.mxu0
  %v548 = vadd.f32 0.0, %v547
  %549 = vmatmul.f32.gmra.mxu0 %v510
  %v550 = vpop.f32.mrf.mxu0
  %v551 = vadd.f32 0.0, %v550
  %552 = vmatmul.f32.gmra.mxu0 %v513
  %v553 = vpop.f32.mrf.mxu0
  %v554 = vadd.f32 0.0, %v553
  %555 = vmatmul.f32.gmra.mxu0 %v516
  %v556 = vpop.f32.mrf.mxu0
  %v557 = vadd.f32 0.0, %v556
  %558 = vmatmul.f32.gmra.mxu0 %v519
  %v559 = vpop.f32.mrf.mxu0
  %v560 = vadd.f32 0.0, %v559
  %561 = vmatmul.f32.gmra.mxu0 %v522
  %v562 = vpop.f32.mrf.mxu0
  %v563 = vadd.f32 0.0, %v562
  %564 = vmatmul.f32.gmra.mxu0 %v525
  %v565 = vpop.f32.mrf.mxu0
  %v566 = vadd.f32 0.0, %v565
  %567 = vmatmul.f32.gmra.mxu0 %v528
  %v568 = vpop.f32.mrf.mxu0
  %v569 = vadd.f32 0.0, %v568
  %570 = vdwg.mxu0
  %v571 = vld [vmem:[#allocation3] sm:$0xff]
  %vm572 = vcmask 64512
  %v573 = vsel %vm572, %v548, -inf
  %v574 = vsel %vm572, %v551, -inf
  %v575 = vsel %vm572, %v554, -inf
  %v576 = vsel %vm572, %v557, -inf
  %v577 = vsel %vm572, %v560, -inf
  %v578 = vmax.f32 %v573, %v577
  %v579 = vsel %vm572, %v563, -inf
  %v580 = vmax.f32 %v574, %v579
  %v581 = vsel %vm572, %v566, -inf
  %v582 = vmax.f32 %v575, %v581
  %v583 = vsel %vm572, %v569, -inf
  %v584 = vmax.f32 %v576, %v583
  %v585 = vmax.f32 %v578, %v580
  %v586 = vmax.f32 %v582, %v584
  %v587 = vmax.f32 %v585, %v586
  %v588 = vmax.f32 %v571, %v587
  %v589 = vsub.f32 %v571, %v588
  %v590 = vmul.f32 %v589, 1.442695
  %v591 = vpow.pop %v590
  %v592 = vsub.f32 %v548, %v588
  %v593 = vsub.f32 %v551, %v588
  %v594 = vsub.f32 %v554, %v588
  %v595 = vsub.f32 %v557, %v588
  %v596 = vsub.f32 %v560, %v588
  %v597 = vsub.f32 %v563, %v588
  %v598 = vsub.f32 %v566, %v588
  %v599 = vsub.f32 %v569, %v588
  %v600 = vmul.f32 %v592, 1.442695
  %v601 = vpow.pop %v600
  %v602 = vmul.f32 %v593, 1.442695
  %v603 = vpow.pop %v602
  %v604 = vmul.f32 %v594, 1.442695
  %v605 = vpow.pop %v604
  %v606 = vmul.f32 %v595, 1.442695
  %v607 = vpow.pop %v606
  %v608 = vmul.f32 %v596, 1.442695
  %v609 = vpow.pop %v608
  %v610 = vmul.f32 %v597, 1.442695
  %v611 = vpow.pop %v610
  %v612 = vmul.f32 %v598, 1.442695
  %v613 = vpow.pop %v612
  %v614 = vmul.f32 %v599, 1.442695
  %v615 = vpow.pop %v614
  %v616 = vld [vmem:[#allocation4] sm:$0xff]
  %v617 = vmul.f32 %v591, %v616
  %v618 = vsel %vm572, %v601, 0.0
  %v619 = vsel %vm572, %v603, 0.0
  %v620 = vadd.f32 %v618, %v619
  %v621 = vsel %vm572, %v605, 0.0
  %v622 = vadd.f32 %v620, %v621
  %v623 = vsel %vm572, %v607, 0.0
  %v624 = vadd.f32 %v622, %v623
  %v625 = vsel %vm572, %v609, 0.0
  %v626 = vadd.f32 %v624, %v625
  %v627 = vsel %vm572, %v611, 0.0
  %v628 = vadd.f32 %v626, %v627
  %v629 = vsel %vm572, %v613, 0.0
  %v630 = vadd.f32 %v628, %v629
  %v631 = vsel %vm572, %v615, 0.0
  %v632 = vadd.f32 %v630, %v631
  %v633 = vadd.f32 %v617, %v632
  %634 = vst.msk [vmem:[#allocation4] sm:$0xff] %vm572, %v633
  %v636 = vsel %vm572, %v601, 0
  %v639 = vsel %vm572, %v603, 0
  %v642 = vsel %vm572, %v605, 0
  %v645 = vsel %vm572, %v607, 0
  %v648 = vsel %vm572, %v609, 0
  %v651 = vsel %vm572, %v611, 0
  %v654 = vsel %vm572, %v613, 0
  %v657 = vsel %vm572, %v615, 0
  %659 = vmatpush.msra.mxu0 0.0
  %660 = vmatpush.msra.mxu0 0.0
  %661 = vmatpush.msra.mxu0 0.0
  %662 = vmatpush.msra.mxu0 0.0
  %663 = vmatpush.msra.mxu0 0.0
  %664 = vmatpush.msra.mxu0 0.0
  %665 = vmatpush.msra.mxu0 0.0
  %666 = vmatpush.msra.mxu0 0.0
  %667 = vmatpush.msra.mxu0 0.0
  %668 = vmatpush.msra.mxu0 0.0
  %669 = vmatpush.msra.mxu0 0.0
  %670 = vmatpush.msra.mxu0 0.0
  %671 = vmatpush.msra.mxu0 0.0
  %672 = vmatpush.msra.mxu0 0.0
  %673 = vmatpush.msra.mxu0 0.0
  %674 = vmatpush.msra.mxu0 %v71
  %675 = vmatmul.f32.gmra.mxu0 %v636
  %v676 = vpop.f32.mrf.mxu0
  %v677 = vadd.f32 0.0, %v676
  %678 = vmatmul.f32.gmra.mxu0 %v639
  %v679 = vpop.f32.mrf.mxu0
  %v680 = vadd.f32 0.0, %v679
  %681 = vmatmul.f32.gmra.mxu0 %v642
  %v682 = vpop.f32.mrf.mxu0
  %v683 = vadd.f32 0.0, %v682
  %684 = vmatmul.f32.gmra.mxu0 %v645
  %v685 = vpop.f32.mrf.mxu0
  %v686 = vadd.f32 0.0, %v685
  %687 = vmatmul.f32.gmra.mxu0 %v648
  %v688 = vpop.f32.mrf.mxu0
  %v689 = vadd.f32 0.0, %v688
  %690 = vmatmul.f32.gmra.mxu0 %v651
  %v691 = vpop.f32.mrf.mxu0
  %v692 = vadd.f32 0.0, %v691
  %693 = vmatmul.f32.gmra.mxu0 %v654
  %v694 = vpop.f32.mrf.mxu0
  %v695 = vadd.f32 0.0, %v694
  %696 = vmatmul.f32.gmra.mxu0 %v657
  %v697 = vpop.f32.mrf.mxu0
  %v698 = vadd.f32 0.0, %v697
  %699 = vdwg.mxu0
  %708 = vrot.lane.b32.xlu0 %v474, 96
  %v709 = vpop.permute.xlu0 %708
  %710 = vrot.lane.b32.xlu0 %v477, 96
  %v711 = vpop.permute.xlu0 %710
  %712 = vrot.lane.b32.xlu0 %v480, 96
  %v713 = vpop.permute.xlu0 %712
  %714 = vrot.lane.b32.xlu0 %v483, 96
  %v715 = vpop.permute.xlu0 %714
  %716 = vrot.lane.b32.xlu0 %v486, 96
  %v717 = vpop.permute.xlu0 %716
  %718 = vrot.lane.b32.xlu0 %v489, 96
  %v719 = vpop.permute.xlu0 %718
  %720 = vrot.lane.b32.xlu0 %v492, 96
  %v721 = vpop.permute.xlu0 %720
  %722 = vrot.lane.b32.xlu0 %v495, 96
  %v723 = vpop.permute.xlu0 %722
  %v732 = vmul.f32 %v677, %v709
  %v733 = vmul.f32 %v680, %v711
  %v734 = vmul.f32 %v683, %v713
  %v735 = vmul.f32 %v686, %v715
  %v736 = vmul.f32 %v689, %v717
  %v737 = vmul.f32 %v692, %v719
  %v738 = vmul.f32 %v695, %v721
  %v739 = vmul.f32 %v698, %v723
  %v740 = vsel %vm218, %v732, 0.0
  %v741 = vsel %vm218, %v733, 0.0
  %v742 = vadd.f32 %v740, %v741
  %v743 = vsel %vm218, %v734, 0.0
  %v744 = vadd.f32 %v742, %v743
  %v745 = vsel %vm218, %v735, 0.0
  %v746 = vadd.f32 %v744, %v745
  %v747 = vsel %vm218, %v736, 0.0
  %v748 = vadd.f32 %v746, %v747
  %v749 = vsel %vm218, %v737, 0.0
  %v750 = vadd.f32 %v748, %v749
  %v751 = vsel %vm218, %v738, 0.0
  %v752 = vadd.f32 %v750, %v751
  %v753 = vsel %vm218, %v739, 0.0
  %v754 = vadd.f32 %v752, %v753
  %v756 = vsel %vm572, %v591, 0
  %758 = vmatpush.msra.mxu0 0.0
  %759 = vmatpush.msra.mxu0 0.0
  %760 = vmatpush.msra.mxu0 0.0
  %761 = vmatpush.msra.mxu0 0.0
  %762 = vmatpush.msra.mxu0 0.0
  %763 = vmatpush.msra.mxu0 0.0
  %764 = vmatpush.msra.mxu0 0.0
  %765 = vmatpush.msra.mxu0 0.0
  %766 = vmatpush.msra.mxu0 0.0
  %767 = vmatpush.msra.mxu0 0.0
  %768 = vmatpush.msra.mxu0 0.0
  %769 = vmatpush.msra.mxu0 0.0
  %770 = vmatpush.msra.mxu0 0.0
  %771 = vmatpush.msra.mxu0 0.0
  %772 = vmatpush.msra.mxu0 0.0
  %773 = vmatpush.msra.mxu0 %v71
  %774 = vmatmul.f32.gmra.mxu0 %v756
  %v775 = vpop.f32.mrf.mxu0
  %v776 = vadd.f32 0.0, %v775
  %777 = vdwg.mxu0
  %v778 = vld [vmem:[#allocation5] sm:$0xff]
  %v779 = vmul.f32 %v776, %v778
  %v780 = vadd.f32 %v779, %v754
  %781 = vst.msk [vmem:[#allocation5] sm:$0xff] %vm218, %v780
  %782 = vst.msk [vmem:[#allocation3] sm:$0xff] %vm572, %v588
  // Predicated region
  $region86: #{class_block_forward.1} parent=0 // pred_check
    %p783 = pneg %p72
  $region87: #{class_block_forward.1} parent=0 // pred_check_branch
    %785 = sbr.rel (%p783) target = $region89
  $region88: #{class_block_forward.1} parent=0 // pred_region
    %v786 = vld [vmem:[%s1] sm:$0xff]
    %v787 = vld [vmem:[#allocation4] sm:$0xff]
    %v788 = vrcp.pop %v787
    %v789 = vmul.f32 %v787, %v788
    %v790 = vsub.f32 2.0, %v789
    %v791 = vmul.f32 %v788, %v790
    %v793 = vsel %vm572, %v791, 0
    %795 = vmatpush.msra.mxu0 0.0
    %796 = vmatpush.msra.mxu0 0.0
    %797 = vmatpush.msra.mxu0 0.0
    %798 = vmatpush.msra.mxu0 0.0
    %799 = vmatpush.msra.mxu0 0.0
    %800 = vmatpush.msra.mxu0 0.0
    %801 = vmatpush.msra.mxu0 0.0
    %802 = vmatpush.msra.mxu0 0.0
    %803 = vmatpush.msra.mxu0 0.0
    %804 = vmatpush.msra.mxu0 0.0
    %805 = vmatpush.msra.mxu0 0.0
    %806 = vmatpush.msra.mxu0 0.0
    %807 = vmatpush.msra.mxu0 0.0
    %808 = vmatpush.msra.mxu0 0.0
    %809 = vmatpush.msra.mxu0 0.0
    %810 = vmatpush.msra.mxu0 %v71
    %811 = vmatmul.f32.gmra.mxu0 %v793
    %v812 = vpop.f32.mrf.mxu0
    %v813 = vadd.f32 0.0, %v812
    %814 = vdwg.mxu0
    %v815 = vld [vmem:[#allocation5] sm:$0xff]
    %v816 = vmul.f32 %v815, %v813
    %v817 = vld [vmem:[%s8] sm:$0xff]
    %v818 = vld [vmem:[%s8 + $0x8] sm:$0xff]
    %v819 = vld [vmem:[%s8 + $0x10] sm:$0xff]
    %v820 = vld [vmem:[%s8 + $0x18] sm:$0xff]
    %v821 = vld [vmem:[%s9] sm:$0x1]
    %v823 = vperm.slane %v821, 0
    %v826 = vsel %vm218, %v816, 0
    %828 = vmatpush.msra.mxu0 0.0
    %829 = vmatpush.msra.mxu0 0.0
    %830 = vmatpush.msra.mxu0 0.0
    %831 = vmatpush.msra.mxu0 0.0
    %832 = vmatpush.msra.mxu0 0.0
    %833 = vmatpush.msra.mxu0 0.0
    %834 = vmatpush.msra.mxu0 0.0
    %835 = vmatpush.msra.mxu0 0.0
    %836 = vmatpush.msra.mxu0 0.0
    %837 = vmatpush.msra.mxu0 0.0
    %838 = vmatpush.msra.mxu0 0.0
    %839 = vmatpush.msra.mxu0 0.0
    %840 = vmatpush.msra.mxu0 %v820
    %841 = vmatpush.msra.mxu0 %v819
    %842 = vmatpush.msra.mxu0 %v818
    %843 = vmatpush.msra.mxu0 %v817
    %844 = vmatmul.f32.gmra.mxu0 %v826
    %v845 = vpop.f32.mrf.mxu0
    %v846 = vadd.f32 %v823, %v845
    %847 = vdwg.mxu0
    %v848 = vld [vmem:[%s10] sm:$0x1]
    %v849 = vld [vmem:[%s11] sm:$0x1]
    %v850 = vsel %vm218, %v846, 0.0
    %851 = vadd.xlane.f32.xlu0 %v850
    %v852 = vpop.xlane.xlu0 %851
    %v853 = vmul.f32 %v852, %v249
    %v854 = vsub.f32 %v846, %v853
    %v855 = vmul.f32 %v854, %v854
    %v856 = vsel %vm218, %v855, 0.0
    %857 = vadd.xlane.f32.xlu0 %v856
    %v858 = vpop.xlane.xlu0 %857
    %v859 = vmul.f32 %v858, %v249
    %v860 = vadd.f32 %v859, 1e-05
    %v861 = vrsqrt.pop %v860
    %v862 = vmul.f32 %v861, %v860
    %v863 = vmul.f32 %v862, %v861
    %v864 = vmul.f32 0.5, %v863
    %v865 = vsub.f32 1.5, %v864
    %v866 = vmul.f32 %v861, %v865
    %vm867 = vweird.f32 %v860
    %vm868 = vweird.f32 %v861
    %vm869 = vmor %vm867, %vm868
    %v870 = vsel %vm869, %v861, %v866
    %v871 = vmul.f32 %v854, %v870
    %v873 = vperm.slane %v848, 0
    %v875 = vmul.f32 %v871, %v873
    %v877 = vperm.slane %v849, 0
    %v879 = vadd.f32 %v875, %v877
    %v880 = vadd.f32 %v786, %v879
    %v881 = vld [vmem:[%s12] sm:$0xff]
    %v882 = vld [vmem:[%s12 + $0x8] sm:$0xff]
    %v883 = vld [vmem:[%s12 + $0x10] sm:$0xff]
    %v884 = vld [vmem:[%s12 + $0x18] sm:$0xff]
    %v885 = vld [vmem:[%s13] sm:$0x1]
    %v887 = vperm.slane %v885, 0
    %v890 = vsel %vm218, %v880, 0
    %892 = vmatpush.msra.mxu0 0.0
    %893 = vmatpush.msra.mxu0 0.0
    %894 = vmatpush.msra.mxu0 0.0
    %895 = vmatpush.msra.mxu0 0.0
    %896 = vmatpush.msra.mxu0 0.0
    %897 = vmatpush.msra.mxu0 0.0
    %898 = vmatpush.msra.mxu0 0.0
    %899 = vmatpush.msra.mxu0 0.0
    %900 = vmatpush.msra.mxu0 0.0
    %901 = vmatpush.msra.mxu0 0.0
    %902 = vmatpush.msra.mxu0 0.0
    %903 = vmatpush.msra.mxu0 0.0
    %904 = vmatpush.msra.mxu0 %v884
    %905 = vmatpush.msra.mxu0 %v883
    %906 = vmatpush.msra.mxu0 %v882
    %907 = vmatpush.msra.mxu0 %v881
    %908 = vmatmul.f32.gmra.mxu0 %v890
    %v909 = vpop.f32.mrf.mxu0
    %v910 = vadd.f32 %v887, %v909
    %911 = vdwg.mxu0
    %v912 = vmax.f32 %v910, 0.0
    %v913 = vld [vmem:[%s14] sm:$0x1]
    %v914 = vld [vmem:[%s15] sm:$0x1]
    %vm915 = vcmask 523264
    %v916 = vsel %vm915, %v912, 0.0
    %917 = vadd.xlane.f32.xlu0 %v916
    %v918 = vpop.xlane.xlu0 %917
    %v919 = vrcp.pop 64.0
    %v920 = vmul.f32 64.0, %v919
    %v921 = vsub.f32 1.0, %v920
    %v922 = vmul.f32 %v919, %v921
    %v923 = vadd.f32 %v919, %v922
    %vm924 = vweird.f32 %v919
    %v925 = vsel %vm924, %v919, %v923
    %v926 = vmul.f32 %v918, %v925
    %v927 = vsub.f32 %v912, %v926
    %v928 = vmul.f32 %v927, %v927
    %v929 = vsel %vm915, %v928, 0.0
    %930 = vadd.xlane.f32.xlu0 %v929
    %v931 = vpop.xlane.xlu0 %930
    %v932 = vmul.f32 %v931, %v925
    %v933 = vadd.f32 %v932, 1e-05
    %v934 = vrsqrt.pop %v933
    %v935 = vmul.f32 %v934, %v933
    %v936 = vmul.f32 %v935, %v934
    %v937 = vmul.f32 0.5, %v936
    %v938 = vsub.f32 1.5, %v937
    %v939 = vmul.f32 %v934, %v938
    %vm940 = vweird.f32 %v933
    %vm941 = vweird.f32 %v934
    %vm942 = vmor %vm940, %vm941
    %v943 = vsel %vm942, %v934, %v939
    %v944 = vmul.f32 %v927, %v943
    %v946 = vperm.slane %v913, 0
    %v948 = vmul.f32 %v944, %v946
    %v950 = vperm.slane %v914, 0
    %v952 = vadd.f32 %v948, %v950
    %v953 = vld [vmem:[%s16] sm:$0xff]
    %v954 = vld [vmem:[%s16 + $0x8] sm:$0xff]
    %v955 = vld [vmem:[%s16 + $0x10] sm:$0xff]
    %v956 = vld [vmem:[%s16 + $0x18] sm:$0xff]
    %v957 = vld [vmem:[%s16 + $0x20] sm:$0xff]
    %v958 = vld [vmem:[%s16 + $0x28] sm:$0xff]
    %v959 = vld [vmem:[%s16 + $0x30] sm:$0xff]
    %v960 = vld [vmem:[%s16 + $0x38] sm:$0xff]
    %v961 = vld [vmem:[%s17] sm:$0x1]
    %v963 = vperm.slane %v961, 0
    %v966 = vsel %vm915, %v952, 0
    %968 = vmatpush.msra.mxu0 0.0
    %969 = vmatpush.msra.mxu0 0.0
    %970 = vmatpush.msra.mxu0 0.0
    %971 = vmatpush.msra.mxu0 0.0
    %972 = vmatpush.msra.mxu0 0.0
    %973 = vmatpush.msra.mxu0 0.0
    %974 = vmatpush.msra.mxu0 0.0
    %975 = vmatpush.msra.mxu0 0.0
    %976 = vmatpush.msra.mxu0 %v960
    %977 = vmatpush.msra.mxu0 %v959
    %978 = vmatpush.msra.mxu0 %v958
    %979 = vmatpush.msra.mxu0 %v957
    %980 = vmatpush.msra.mxu0 %v956
    %981 = vmatpush.msra.mxu0 %v955
    %982 = vmatpush.msra.mxu0 %v954
    %983 = vmatpush.msra.mxu0 %v953
    %984 = vmatmul.f32.gmra.mxu0 %v966
    %v985 = vpop.f32.mrf.mxu0
    %v986 = vadd.f32 %v963, %v985
    %987 = vdwg.mxu0
    %v988 = vadd.f32 %v880, %v986
    %989 = vst.msk [vmem:[%s20] sm:$0xff] %vm218, %v988
  $region89: #{class_block_forward.1} parent=0 // pred_fallthru
    _
  // Predicated region
  $region90: #{class_block_forward.1} parent=0 // pred_check
    _
  $region91: #{class_block_forward.1} parent=0 // pred_check_branch
    %991 = sbr.rel (0) target = $region93
  $region92: #{class_block_forward.1} parent=0 // pred_region
    _
  $region93: #{class_block_forward.1} parent=0 // pred_fallthru
    _
  // Predicated region
  $region94: #{class_block_forward.1} parent=0 // pred_check
    _
  $region95: #{class_block_forward.1} parent=0 // pred_check_branch
    %993 = sbr.rel (0) target = $region97
  $region96: #{class_block_forward.1} parent=0 // pred_region
    _
  $region97: #{class_block_forward.1} parent=0 // pred_fallthru
    _

</llo_original>
